<compile_context>
chip_gen: v6e
topology: v6e:2x2x1
jax: 0.10.0
libtpu: 0.0.40
codegen_flags: <defaults>
</compile_context>

<pallas_src>
import functools

import jax
import jax.numpy as jnp
from jax.experimental import pallas as pl
from jax.experimental.pallas import tpu as pltpu


def _conv_kernel(x_ref, w_ref, b_ref, o_ref, acc_ref, *, k, s, dh, dw,
                 H_out, W_out, weight_resident):
    """One grid step = one (batch, out-depth/expert, depth-tap) triple.

    x_ref:   (Hp, Wp, C_in)          bf16 padded input plane for this (batch, depth tap)
    w_ref:   (E*k*k, C_in, C_out_p)  bf16 full weight      (weight_resident=True)
             (k*k,   C_in, C_out_p)  bf16 depth-tap slice  (weight_resident=False)
    b_ref:   (1, C_out_p)            f32 per-expert bias row
    o_ref:   (H_out*W_out, C_out_p)  output tile (resident across the tap axis)
    acc_ref: (H_out*W_out, C_out_p)  f32 accumulator scratch
    """
    kd = pl.program_id(2)
    n_kd = pl.num_programs(2)
    M = H_out * W_out

    @pl.when(kd == 0)
    def _init():
        acc_ref[...] = jnp.zeros_like(acc_ref)

    acc = acc_ref[...]                                       # (M, C_out_p) f32
    for i in range(k):
        for j in range(k):
            if s == 1:
                xs = x_ref[pl.ds(i * dh, H_out), pl.ds(j * dw, W_out), :]
            else:
                xs = x_ref[pl.ds(i * dh, H_out, stride=s),
                           pl.ds(j * dw, W_out, stride=s), :]
            xs2 = xs.reshape(M, xs.shape[-1])                # (M, C_in)
            if weight_resident:
                w_tap = w_ref[kd * (k * k) + i * k + j]      # (C_in, C_out_p)
            else:
                w_tap = w_ref[i * k + j]
            acc = acc + jnp.dot(xs2, w_tap, preferred_element_type=jnp.float32)
    acc_ref[...] = acc

    @pl.when(kd == n_kd - 1)
    def _finalize():
        o_ref[...] = (acc_ref[...] + b_ref[...]).astype(o_ref.dtype)


def multi_expert_conv2d(x, weight, bias=None, *, stride=1, padding=0, dilation=1):
    """Forward of MultiExpertConv2d.

    x:      (B, C_in, D, H, W)
    weight: (C_out, C_in, num_experts, k, k)
    bias:   (num_experts, C_out) or None
    Returns (B, C_out, D_out, H_out, W_out) with D_out == num_experts.
    """
    B, C_in, D, H, W = x.shape
    C_out, C_in2, E, k1, k2 = weight.shape
    assert C_in2 == C_in and k1 == k2
    k = k1
    if isinstance(dilation, tuple):
        dd, dh, dw = dilation
    else:
        dd = dh = dw = dilation
    s, p = stride, padding

    H_out = (H + 2 * p - dh * (k - 1) - 1) // s + 1
    W_out = (W + 2 * p - dw * (k - 1) - 1) // s + 1
    D_out = D - dd * (E - 1)
    assert D_out == E, (
        "MultiExpertConv2d bias broadcast requires output depth == num_experts")

    M = H_out * W_out
    LANE = 128
    C_out_p = ((C_out + LANE - 1) // LANE) * LANE            # lane-dense output channels
    out_dtype = x.dtype
    compute_dtype = jnp.bfloat16

    # ---- layout plumbing only (all FLOPs happen inside the kernel) ----------------
    Hp, Wp = H + 2 * p, W + 2 * p
    x_cl = jnp.transpose(x, (0, 2, 3, 4, 1)).astype(compute_dtype)   # (B,D,H,W,Cin)
    x_pad = jnp.pad(x_cl, ((0, 0), (0, 0), (p, p), (p, p), (0, 0)))
    x_flat = x_pad.reshape(B * D, Hp, Wp, C_in)

    w_t = jnp.transpose(weight, (2, 3, 4, 1, 0)).reshape(E * k * k, C_in, C_out)
    w_t = jnp.pad(w_t, ((0, 0), (0, 0), (0, C_out_p - C_out))).astype(compute_dtype)

    if bias is None:
        bias_arr = jnp.zeros((E, C_out), jnp.float32)
    else:
        bias_arr = bias.astype(jnp.float32)
    b3 = jnp.pad(bias_arr, ((0, 0), (0, C_out_p - C_out))).reshape(E, 1, C_out_p)
    # --------------------------------------------------------------------------------

    w_block_bytes = k * k * C_in * C_out_p * 2               # one depth-tap slice, bf16
    w_total_bytes = E * w_block_bytes
    weight_resident = w_total_bytes <= 8 * 1024 * 1024
    if weight_resident:
        # Whole weight lives in VMEM once (constant index_map => single DMA) instead of
        # being re-streamed for every (batch, expert) pair.
        w_spec = pl.BlockSpec((E * k * k, C_in, C_out_p), lambda b, e, kd: (0, 0, 0))
    else:
        w_spec = pl.BlockSpec((k * k, C_in, C_out_p), lambda b, e, kd: (kd, 0, 0))

    # VMEM budget: double-buffered input plane + weights + double-buffered output block
    # + f32 accumulator + bias, with 2x headroom; capped at v7x's 64 MiB physical VMEM.
    in_bytes = Hp * Wp * C_in * 2
    out_bytes = M * C_out_p * jnp.dtype(out_dtype).itemsize
    vmem_est = (2 * in_bytes
                + 2 * (w_total_bytes if weight_resident else w_block_bytes)
                + 2 * out_bytes
                + M * C_out_p * 4
                + 2 * C_out_p * 4)
    vmem_limit = int(min(max(2 * vmem_est, 32 * 1024 * 1024), 64 * 1024 * 1024))

    kernel = functools.partial(
        _conv_kernel, k=k, s=s, dh=dh, dw=dw, H_out=H_out, W_out=W_out,
        weight_resident=weight_resident)

    out_flat = pl.pallas_call(
        kernel,
        out_shape=jax.ShapeDtypeStruct((B * D_out, M, C_out_p), out_dtype),
        grid=(B, D_out, E),
        in_specs=[
            # bf16 padded input plane for (batch b, input depth e + kd*dd)
            pl.BlockSpec((None, Hp, Wp, C_in),
                         lambda b, e, kd: (b * D + e + kd * dd, 0, 0, 0)),
            w_spec,
            # per-expert bias row e
            pl.BlockSpec((None, 1, C_out_p), lambda b, e, kd: (e, 0, 0)),
        ],
        out_specs=pl.BlockSpec((None, M, C_out_p),
                               lambda b, e, kd: (b * D_out + e, 0, 0)),
        scratch_shapes=[pltpu.VMEM((M, C_out_p), jnp.float32)],
        compiler_params=pltpu.CompilerParams(
            dimension_semantics=("parallel", "parallel", "arbitrary"),
            vmem_limit_bytes=vmem_limit),
    )(x_flat, w_t, b3)

    out = out_flat[:, :, :C_out].reshape(B, D_out, H_out, W_out, C_out)
    return jnp.transpose(out, (0, 4, 1, 2, 3))               # (B, C_out, D_out, H_out, W_out)


if __name__ == "__main__":
    key = jax.random.PRNGKey(0)
    kx, kw, kb = jax.random.split(key, 3)

    B, C_in, C_out = 2, 4, 8
    num_experts, ksize = 2, 3
    stride, padding, dilation = 1, 1, 1
    H = W = 8
    # Input depth such that the conv output depth equals num_experts (the module's
    # intended usage, required by its bias broadcast).
    D = dilation * (num_experts - 1) + num_experts           # = 3

    x = jax.random.normal(kx, (B, C_in, D, H, W), dtype=jnp.float32)
    weight = jax.random.normal(
        kw, (C_out, C_in, num_experts, ksize, ksize), dtype=jnp.float32)
    # The module initializes bias to zeros; use small random values so the per-expert
    # bias path of the kernel is actually exercised numerically.
    bias = 0.1 * jax.random.normal(kb, (num_experts, C_out), dtype=jnp.float32)

    y = multi_expert_conv2d(x, weight, bias,
                            stride=stride, padding=padding, dilation=dilation)
    jax.block_until_ready(y)

    # Reference: XLA conv3d + broadcast bias, same semantics as the PyTorch module.
    # The kernel feeds the MXU bf16 operands with f32 accumulation, so the reference
    # uses the same bf16-rounded inputs.
    x_r = x.astype(jnp.bfloat16).astype(jnp.float32)
    w_r = weight.astype(jnp.bfloat16).astype(jnp.float32)
    y_ref = jax.lax.conv_general_dilated(
        x_r, w_r,
        window_strides=(1, stride, stride),
        padding=((0, 0), (padding, padding), (padding, padding)),
        rhs_dilation=(dilation, dilation, dilation),
        dimension_numbers=("NCDHW", "OIDHW", "NCDHW"),
    ) + jnp.transpose(bias)[None, :, :, None, None]          # 'e d -> () d e () ()'

    assert y.shape == (B, C_out, num_experts, H, W), y.shape
    assert jnp.allclose(y, y_ref, atol=5e-3, rtol=5e-3), "mismatch vs reference"
    print("KERNEL_OK")
</pallas_src>

<mosaic_0001>
module attributes {stable_mosaic.version = 11 : i64} {
  func.func @_conv_kernel(%arg0: i32, %arg1: i32, %arg2: i32, %arg3: memref<1x10x10x4xbf16, #tpu.memory_space<vmem>>, %arg4: memref<18x4x128xbf16, #tpu.memory_space<vmem>>, %arg5: memref<1x1x128xf32, #tpu.memory_space<vmem>>, %arg6: memref<1x64x128xf32, #tpu.memory_space<vmem>>, %arg7: memref<64x128xf32, #tpu.memory_space<vmem>>) attributes {dimension_semantics = [#tpu.dimension_semantics<parallel>, #tpu.dimension_semantics<parallel>, #tpu.dimension_semantics<arbitrary>], iteration_bounds = array<i64: 2, 2, 2>, scalar_prefetch = 0 : i64, scratch_operands = 1 : i64, tpu.core_type = #tpu.core_type<tc>, window_params = [{transform_indices = @transform_0, window_bounds = array<i64: 1, 10, 10, 4>}, {pipeline_mode = #tpu.pipeline_mode<synchronous>, transform_indices = @transform_1, window_bounds = array<i64: 18, 4, 128>}, {transform_indices = @transform_2, window_bounds = array<i64: 1, 1, 128>}, {transform_indices = @transform_3, window_bounds = array<i64: 1, 64, 128>}]} {
    %c0_i32 = arith.constant 0 : i32
    %0 = arith.cmpi eq, %arg2, %c0_i32 : i32
    %1 = arith.extui %0 : i1 to i32
    %c0_i32_0 = arith.constant 0 : i32
    %2 = arith.cmpi ne, %1, %c0_i32_0 : i32
    scf.if %2 {
      %cst_88 = arith.constant 0.000000e+00 : f32
      %107 = vector.broadcast %cst_88 : f32 to vector<64x128xf32>
      %c0_89 = arith.constant 0 : index
      %c0_90 = arith.constant 0 : index
      %108 = vector.load %arg7[%c0_89, %c0_90] : memref<64x128xf32, #tpu.memory_space<vmem>>, vector<64x128xf32>
      tpu.vector_store %arg7[%c0_89, %c0_90], %107 {strides = array<i32>} : memref<64x128xf32, #tpu.memory_space<vmem>>, vector<64x128xf32>,
    } else {
    }
    %c0 = arith.constant 0 : index
    %c0_1 = arith.constant 0 : index
    %3 = vector.load %arg7[%c0, %c0_1] : memref<64x128xf32, #tpu.memory_space<vmem>>, vector<64x128xf32>
    %c0_2 = arith.constant 0 : index
    %c0_3 = arith.constant 0 : index
    %c0_4 = arith.constant 0 : index
    %c0_5 = arith.constant 0 : index
    %4 = vector.load %arg3[%c0_2, %c0_3, %c0_4, %c0_5] : memref<1x10x10x4xbf16, #tpu.memory_space<vmem>>, vector<1x8x8x4xbf16>
    %5 = vector.shape_cast %4 : vector<1x8x8x4xbf16> to vector<8x8x4xbf16>
    %6 = vector.shape_cast %5 : vector<8x8x4xbf16> to vector<64x4xbf16>
    %c9_i32 = arith.constant 9 : i32
    %7 = arith.muli %arg2, %c9_i32 : i32
    %c0_i32_6 = arith.constant 0 : i32
    %8 = arith.addi %7, %c0_i32_6 : i32
    %c0_i32_7 = arith.constant 0 : i32
    %9 = arith.addi %8, %c0_i32_7 : i32
    %10 = arith.index_cast %9 : i32 to index
    %c0_8 = arith.constant 0 : index
    %c0_9 = arith.constant 0 : index
    %11 = vector.load %arg4[%10, %c0_8, %c0_9] : memref<18x4x128xbf16, #tpu.memory_space<vmem>>, vector<1x4x128xbf16>
    %12 = vector.shape_cast %11 : vector<1x4x128xbf16> to vector<4x128xbf16>
    %cst = arith.constant dense<0.000000e+00> : vector<64x128xf32>
    %13 = tpu.matmul %6, %12, %cst {dimension_numbers = #tpu.dot_dimension_numbers<[1], [0], [0], [1], [0, 0, 1, 1], [], []>} : vector<64x4xbf16>, vector<4x128xbf16>, vector<64x128xf32> -> vector<64x128xf32>
    %14 = arith.addf %3, %13 : vector<64x128xf32>
    %c0_10 = arith.constant 0 : index
    %c0_11 = arith.constant 0 : index
    %c1 = arith.constant 1 : index
    %c0_12 = arith.constant 0 : index
    %15 = vector.load %arg3[%c0_10, %c0_11, %c1, %c0_12] : memref<1x10x10x4xbf16, #tpu.memory_space<vmem>>, vector<1x8x8x4xbf16>
    %16 = vector.shape_cast %15 : vector<1x8x8x4xbf16> to vector<8x8x4xbf16>
    %17 = vector.shape_cast %16 : vector<8x8x4xbf16> to vector<64x4xbf16>
    %c9_i32_13 = arith.constant 9 : i32
    %18 = arith.muli %arg2, %c9_i32_13 : i32
    %c0_i32_14 = arith.constant 0 : i32
    %19 = arith.addi %18, %c0_i32_14 : i32
    %c1_i32 = arith.constant 1 : i32
    %20 = arith.addi %19, %c1_i32 : i32
    %21 = arith.index_cast %20 : i32 to index
    %c0_15 = arith.constant 0 : index
    %c0_16 = arith.constant 0 : index
    %22 = vector.load %arg4[%21, %c0_15, %c0_16] : memref<18x4x128xbf16, #tpu.memory_space<vmem>>, vector<1x4x128xbf16>
    %23 = vector.shape_cast %22 : vector<1x4x128xbf16> to vector<4x128xbf16>
    %cst_17 = arith.constant dense<0.000000e+00> : vector<64x128xf32>
    %24 = tpu.matmul %17, %23, %cst_17 {dimension_numbers = #tpu.dot_dimension_numbers<[1], [0], [0], [1], [0, 0, 1, 1], [], []>} : vector<64x4xbf16>, vector<4x128xbf16>, vector<64x128xf32> -> vector<64x128xf32>
    %25 = arith.addf %14, %24 : vector<64x128xf32>
    %c0_18 = arith.constant 0 : index
    %c0_19 = arith.constant 0 : index
    %c2 = arith.constant 2 : index
    %c0_20 = arith.constant 0 : index
    %26 = vector.load %arg3[%c0_18, %c0_19, %c2, %c0_20] : memref<1x10x10x4xbf16, #tpu.memory_space<vmem>>, vector<1x8x8x4xbf16>
    %27 = vector.shape_cast %26 : vector<1x8x8x4xbf16> to vector<8x8x4xbf16>
    %28 = vector.shape_cast %27 : vector<8x8x4xbf16> to vector<64x4xbf16>
    %c9_i32_21 = arith.constant 9 : i32
    %29 = arith.muli %arg2, %c9_i32_21 : i32
    %c0_i32_22 = arith.constant 0 : i32
    %30 = arith.addi %29, %c0_i32_22 : i32
    %c2_i32 = arith.constant 2 : i32
    %31 = arith.addi %30, %c2_i32 : i32
    %32 = arith.index_cast %31 : i32 to index
    %c0_23 = arith.constant 0 : index
    %c0_24 = arith.constant 0 : index
    %33 = vector.load %arg4[%32, %c0_23, %c0_24] : memref<18x4x128xbf16, #tpu.memory_space<vmem>>, vector<1x4x128xbf16>
    %34 = vector.shape_cast %33 : vector<1x4x128xbf16> to vector<4x128xbf16>
    %cst_25 = arith.constant dense<0.000000e+00> : vector<64x128xf32>
    %35 = tpu.matmul %28, %34, %cst_25 {dimension_numbers = #tpu.dot_dimension_numbers<[1], [0], [0], [1], [0, 0, 1, 1], [], []>} : vector<64x4xbf16>, vector<4x128xbf16>, vector<64x128xf32> -> vector<64x128xf32>
    %36 = arith.addf %25, %35 : vector<64x128xf32>
    %c0_26 = arith.constant 0 : index
    %c1_27 = arith.constant 1 : index
    %c0_28 = arith.constant 0 : index
    %c0_29 = arith.constant 0 : index
    %37 = vector.load %arg3[%c0_26, %c1_27, %c0_28, %c0_29] : memref<1x10x10x4xbf16, #tpu.memory_space<vmem>>, vector<1x8x8x4xbf16>
    %38 = vector.shape_cast %37 : vector<1x8x8x4xbf16> to vector<8x8x4xbf16>
    %39 = vector.shape_cast %38 : vector<8x8x4xbf16> to vector<64x4xbf16>
    %c9_i32_30 = arith.constant 9 : i32
    %40 = arith.muli %arg2, %c9_i32_30 : i32
    %c3_i32 = arith.constant 3 : i32
    %41 = arith.addi %40, %c3_i32 : i32
    %c0_i32_31 = arith.constant 0 : i32
    %42 = arith.addi %41, %c0_i32_31 : i32
    %43 = arith.index_cast %42 : i32 to index
    %c0_32 = arith.constant 0 : index
    %c0_33 = arith.constant 0 : index
    %44 = vector.load %arg4[%43, %c0_32, %c0_33] : memref<18x4x128xbf16, #tpu.memory_space<vmem>>, vector<1x4x128xbf16>
    %45 = vector.shape_cast %44 : vector<1x4x128xbf16> to vector<4x128xbf16>
    %cst_34 = arith.constant dense<0.000000e+00> : vector<64x128xf32>
    %46 = tpu.matmul %39, %45, %cst_34 {dimension_numbers = #tpu.dot_dimension_numbers<[1], [0], [0], [1], [0, 0, 1, 1], [], []>} : vector<64x4xbf16>, vector<4x128xbf16>, vector<64x128xf32> -> vector<64x128xf32>
    %47 = arith.addf %36, %46 : vector<64x128xf32>
    %c0_35 = arith.constant 0 : index
    %c1_36 = arith.constant 1 : index
    %c1_37 = arith.constant 1 : index
    %c0_38 = arith.constant 0 : index
    %48 = vector.load %arg3[%c0_35, %c1_36, %c1_37, %c0_38] : memref<1x10x10x4xbf16, #tpu.memory_space<vmem>>, vector<1x8x8x4xbf16>
    %49 = vector.shape_cast %48 : vector<1x8x8x4xbf16> to vector<8x8x4xbf16>
    %50 = vector.shape_cast %49 : vector<8x8x4xbf16> to vector<64x4xbf16>
    %c9_i32_39 = arith.constant 9 : i32
    %51 = arith.muli %arg2, %c9_i32_39 : i32
    %c3_i32_40 = arith.constant 3 : i32
    %52 = arith.addi %51, %c3_i32_40 : i32
    %c1_i32_41 = arith.constant 1 : i32
    %53 = arith.addi %52, %c1_i32_41 : i32
    %54 = arith.index_cast %53 : i32 to index
    %c0_42 = arith.constant 0 : index
    %c0_43 = arith.constant 0 : index
    %55 = vector.load %arg4[%54, %c0_42, %c0_43] : memref<18x4x128xbf16, #tpu.memory_space<vmem>>, vector<1x4x128xbf16>
    %56 = vector.shape_cast %55 : vector<1x4x128xbf16> to vector<4x128xbf16>
    %cst_44 = arith.constant dense<0.000000e+00> : vector<64x128xf32>
    %57 = tpu.matmul %50, %56, %cst_44 {dimension_numbers = #tpu.dot_dimension_numbers<[1], [0], [0], [1], [0, 0, 1, 1], [], []>} : vector<64x4xbf16>, vector<4x128xbf16>, vector<64x128xf32> -> vector<64x128xf32>
    %58 = arith.addf %47, %57 : vector<64x128xf32>
    %c0_45 = arith.constant 0 : index
    %c1_46 = arith.constant 1 : index
    %c2_47 = arith.constant 2 : index
    %c0_48 = arith.constant 0 : index
    %59 = vector.load %arg3[%c0_45, %c1_46, %c2_47, %c0_48] : memref<1x10x10x4xbf16, #tpu.memory_space<vmem>>, vector<1x8x8x4xbf16>
    %60 = vector.shape_cast %59 : vector<1x8x8x4xbf16> to vector<8x8x4xbf16>
    %61 = vector.shape_cast %60 : vector<8x8x4xbf16> to vector<64x4xbf16>
    %c9_i32_49 = arith.constant 9 : i32
    %62 = arith.muli %arg2, %c9_i32_49 : i32
    %c3_i32_50 = arith.constant 3 : i32
    %63 = arith.addi %62, %c3_i32_50 : i32
    %c2_i32_51 = arith.constant 2 : i32
    %64 = arith.addi %63, %c2_i32_51 : i32
    %65 = arith.index_cast %64 : i32 to index
    %c0_52 = arith.constant 0 : index
    %c0_53 = arith.constant 0 : index
    %66 = vector.load %arg4[%65, %c0_52, %c0_53] : memref<18x4x128xbf16, #tpu.memory_space<vmem>>, vector<1x4x128xbf16>
    %67 = vector.shape_cast %66 : vector<1x4x128xbf16> to vector<4x128xbf16>
    %cst_54 = arith.constant dense<0.000000e+00> : vector<64x128xf32>
    %68 = tpu.matmul %61, %67, %cst_54 {dimension_numbers = #tpu.dot_dimension_numbers<[1], [0], [0], [1], [0, 0, 1, 1], [], []>} : vector<64x4xbf16>, vector<4x128xbf16>, vector<64x128xf32> -> vector<64x128xf32>
    %69 = arith.addf %58, %68 : vector<64x128xf32>
    %c0_55 = arith.constant 0 : index
    %c2_56 = arith.constant 2 : index
    %c0_57 = arith.constant 0 : index
    %c0_58 = arith.constant 0 : index
    %70 = vector.load %arg3[%c0_55, %c2_56, %c0_57, %c0_58] : memref<1x10x10x4xbf16, #tpu.memory_space<vmem>>, vector<1x8x8x4xbf16>
    %71 = vector.shape_cast %70 : vector<1x8x8x4xbf16> to vector<8x8x4xbf16>
    %72 = vector.shape_cast %71 : vector<8x8x4xbf16> to vector<64x4xbf16>
    %c9_i32_59 = arith.constant 9 : i32
    %73 = arith.muli %arg2, %c9_i32_59 : i32
    %c6_i32 = arith.constant 6 : i32
    %74 = arith.addi %73, %c6_i32 : i32
    %c0_i32_60 = arith.constant 0 : i32
    %75 = arith.addi %74, %c0_i32_60 : i32
    %76 = arith.index_cast %75 : i32 to index
    %c0_61 = arith.constant 0 : index
    %c0_62 = arith.constant 0 : index
    %77 = vector.load %arg4[%76, %c0_61, %c0_62] : memref<18x4x128xbf16, #tpu.memory_space<vmem>>, vector<1x4x128xbf16>
    %78 = vector.shape_cast %77 : vector<1x4x128xbf16> to vector<4x128xbf16>
    %cst_63 = arith.constant dense<0.000000e+00> : vector<64x128xf32>
    %79 = tpu.matmul %72, %78, %cst_63 {dimension_numbers = #tpu.dot_dimension_numbers<[1], [0], [0], [1], [0, 0, 1, 1], [], []>} : vector<64x4xbf16>, vector<4x128xbf16>, vector<64x128xf32> -> vector<64x128xf32>
    %80 = arith.addf %69, %79 : vector<64x128xf32>
    %c0_64 = arith.constant 0 : index
    %c2_65 = arith.constant 2 : index
    %c1_66 = arith.constant 1 : index
    %c0_67 = arith.constant 0 : index
    %81 = vector.load %arg3[%c0_64, %c2_65, %c1_66, %c0_67] : memref<1x10x10x4xbf16, #tpu.memory_space<vmem>>, vector<1x8x8x4xbf16>
    %82 = vector.shape_cast %81 : vector<1x8x8x4xbf16> to vector<8x8x4xbf16>
    %83 = vector.shape_cast %82 : vector<8x8x4xbf16> to vector<64x4xbf16>
    %c9_i32_68 = arith.constant 9 : i32
    %84 = arith.muli %arg2, %c9_i32_68 : i32
    %c6_i32_69 = arith.constant 6 : i32
    %85 = arith.addi %84, %c6_i32_69 : i32
    %c1_i32_70 = arith.constant 1 : i32
    %86 = arith.addi %85, %c1_i32_70 : i32
    %87 = arith.index_cast %86 : i32 to index
    %c0_71 = arith.constant 0 : index
    %c0_72 = arith.constant 0 : index
    %88 = vector.load %arg4[%87, %c0_71, %c0_72] : memref<18x4x128xbf16, #tpu.memory_space<vmem>>, vector<1x4x128xbf16>
    %89 = vector.shape_cast %88 : vector<1x4x128xbf16> to vector<4x128xbf16>
    %cst_73 = arith.constant dense<0.000000e+00> : vector<64x128xf32>
    %90 = tpu.matmul %83, %89, %cst_73 {dimension_numbers = #tpu.dot_dimension_numbers<[1], [0], [0], [1], [0, 0, 1, 1], [], []>} : vector<64x4xbf16>, vector<4x128xbf16>, vector<64x128xf32> -> vector<64x128xf32>
    %91 = arith.addf %80, %90 : vector<64x128xf32>
    %c0_74 = arith.constant 0 : index
    %c2_75 = arith.constant 2 : index
    %c2_76 = arith.constant 2 : index
    %c0_77 = arith.constant 0 : index
    %92 = vector.load %arg3[%c0_74, %c2_75, %c2_76, %c0_77] : memref<1x10x10x4xbf16, #tpu.memory_space<vmem>>, vector<1x8x8x4xbf16>
    %93 = vector.shape_cast %92 : vector<1x8x8x4xbf16> to vector<8x8x4xbf16>
    %94 = vector.shape_cast %93 : vector<8x8x4xbf16> to vector<64x4xbf16>
    %c9_i32_78 = arith.constant 9 : i32
    %95 = arith.muli %arg2, %c9_i32_78 : i32
    %c6_i32_79 = arith.constant 6 : i32
    %96 = arith.addi %95, %c6_i32_79 : i32
    %c2_i32_80 = arith.constant 2 : i32
    %97 = arith.addi %96, %c2_i32_80 : i32
    %98 = arith.index_cast %97 : i32 to index
    %c0_81 = arith.constant 0 : index
    %c0_82 = arith.constant 0 : index
    %99 = vector.load %arg4[%98, %c0_81, %c0_82] : memref<18x4x128xbf16, #tpu.memory_space<vmem>>, vector<1x4x128xbf16>
    %100 = vector.shape_cast %99 : vector<1x4x128xbf16> to vector<4x128xbf16>
    %cst_83 = arith.constant dense<0.000000e+00> : vector<64x128xf32>
    %101 = tpu.matmul %94, %100, %cst_83 {dimension_numbers = #tpu.dot_dimension_numbers<[1], [0], [0], [1], [0, 0, 1, 1], [], []>} : vector<64x4xbf16>, vector<4x128xbf16>, vector<64x128xf32> -> vector<64x128xf32>
    %102 = arith.addf %91, %101 : vector<64x128xf32>
    %c0_84 = arith.constant 0 : index
    %c0_85 = arith.constant 0 : index
    %103 = vector.load %arg7[%c0_84, %c0_85] : memref<64x128xf32, #tpu.memory_space<vmem>>, vector<64x128xf32>
    tpu.vector_store %arg7[%c0_84, %c0_85], %102 {strides = array<i32>} : memref<64x128xf32, #tpu.memory_space<vmem>>, vector<64x128xf32>,
    %c1_i32_86 = arith.constant 1 : i32
    %104 = arith.cmpi eq, %arg2, %c1_i32_86 : i32
    %105 = arith.extui %104 : i1 to i32
    %c0_i32_87 = arith.constant 0 : i32
    %106 = arith.cmpi ne, %105, %c0_i32_87 : i32
    scf.if %106 {
      %c0_88 = arith.constant 0 : index
      %c0_89 = arith.constant 0 : index
      %107 = vector.load %arg7[%c0_88, %c0_89] : memref<64x128xf32, #tpu.memory_space<vmem>>, vector<64x128xf32>
      %c0_90 = arith.constant 0 : index
      %c0_91 = arith.constant 0 : index
      %c0_92 = arith.constant 0 : index
      %108 = vector.load %arg5[%c0_90, %c0_91, %c0_92] : memref<1x1x128xf32, #tpu.memory_space<vmem>>, vector<1x1x128xf32>
      %109 = vector.shape_cast %108 : vector<1x1x128xf32> to vector<1x128xf32>
      %110 = vector.broadcast %109 : vector<1x128xf32> to vector<64x128xf32>
      %111 = arith.addf %107, %110 : vector<64x128xf32>
      %c0_93 = arith.constant 0 : index
      %c0_94 = arith.constant 0 : index
      %c0_95 = arith.constant 0 : index
      %112 = vector.load %arg6[%c0_93, %c0_94, %c0_95] : memref<1x64x128xf32, #tpu.memory_space<vmem>>, vector<1x64x128xf32>
      %113 = vector.shape_cast %112 : vector<1x64x128xf32> to vector<64x128xf32>
      %114 = vector.shape_cast %111 : vector<64x128xf32> to vector<1x64x128xf32>
      tpu.vector_store %arg6[%c0_93, %c0_94, %c0_95], %114 {strides = array<i32>} : memref<1x64x128xf32, #tpu.memory_space<vmem>>, vector<1x64x128xf32>,
    } else {
    }
    return
  }
  func.func @transform_0(%arg0: i32, %arg1: i32, %arg2: i32) -> (i32, i32, i32, i32) {
    %c3_i32 = arith.constant 3 : i32
    %0 = arith.muli %arg0, %c3_i32 : i32
    %1 = arith.addi %0, %arg1 : i32
    %c1_i32 = arith.constant 1 : i32
    %2 = arith.muli %arg2, %c1_i32 : i32
    %3 = arith.addi %1, %2 : i32
    %c0_i32 = arith.constant 0 : i32
    %c0_i32_0 = arith.constant 0 : i32
    %c0_i32_1 = arith.constant 0 : i32
    %c0_i32_2 = arith.constant 0 : i32
    return %3, %c0_i32, %c0_i32_0, %c0_i32_1 : i32, i32, i32, i32
  }
  func.func @transform_1(%arg0: i32, %arg1: i32, %arg2: i32) -> (i32, i32, i32) {
    %c0_i32 = arith.constant 0 : i32
    %c0_i32_0 = arith.constant 0 : i32
    %c0_i32_1 = arith.constant 0 : i32
    %c0_i32_2 = arith.constant 0 : i32
    return %c0_i32, %c0_i32_0, %c0_i32_1 : i32, i32, i32
  }
  func.func @transform_2(%arg0: i32, %arg1: i32, %arg2: i32) -> (i32, i32, i32) {
    %c0_i32 = arith.constant 0 : i32
    %c0_i32_0 = arith.constant 0 : i32
    %c0_i32_1 = arith.constant 0 : i32
    return %arg1, %c0_i32, %c0_i32_0 : i32, i32, i32
  }
  func.func @transform_3(%arg0: i32, %arg1: i32, %arg2: i32) -> (i32, i32, i32) {
    %c2_i32 = arith.constant 2 : i32
    %0 = arith.muli %arg0, %c2_i32 : i32
    %1 = arith.addi %0, %arg1 : i32
    %c0_i32 = arith.constant 0 : i32
    %c0_i32_0 = arith.constant 0 : i32
    %c0_i32_1 = arith.constant 0 : i32
    return %1, %c0_i32, %c0_i32_0 : i32, i32, i32
  }
}

</mosaic_0001>

<llo_original>
// kernel: tpu_custom_call.1
$region0: #{tpu_custom_call.1}
  #allocation0 [shape = 'u32[]', space=smem, size = 0x4, offset = 0x4, fixed_abs, tag = 'smem constant byte address 0x4 - core index']
  #allocation1 [shape = 'u32[144,128]{1,0:T(1,128)}', space=vmem, size = 0x12000, scoped, tag = 'internal scratch']
  #allocation2 [shape = 'f32[64,128]{1,0:T(8,128)}', space=vmem, size = 0x8000, scoped, tag = 'scratch operand']
  %s0 = inlined_call_operand.vmem [shape: bf16[6,10,10,4], index: 0, kind: input, shape index: {}]
  %s1 = inlined_call_operand.vmem [shape: bf16[18,4,128], index: 1, kind: input, shape index: {}]
  %s2 = inlined_call_operand.vmem [shape: f32[2,1,128], index: 2, kind: input, shape index: {}]
  %s3 = inlined_call_operand.hbm [shape: f32[4,64,128], index: 3, kind: output, shape index: {}]
  %s4 = sld [smem:[#allocation0]]
  $region53: #{tpu_custom_call.1} parent=0
    _
  %s6 = ssub.s32 1, %s4
  %s7 = scalar_select 0, %s6, %s4
  $region1: #{tpu_custom_call.1} parent=0
    #allocation3 [shape = 'u8[65536]{0}', space=vmem, size = 0x10000, scoped, tag = 'output window, operand 0']
    #allocation4 [shape = 's32[2]{0}', space=sflag, size = 0x8, scoped, tag = 'scoped memory for tpu_custom_call.1']
    %8 = vsyncpa [#allocation4], 0
    %s9 = scalar_lea.sflag [#allocation4], 1
    %10 = vsyncpa %s9, 0
    loop: start=0, step=1, limit=10
    $region2: #{tpu_custom_call.1} parent=1 // loop_pre_header
      _
    $region3: #{tpu_custom_call.1} parent=1 // loop_header
      %s12 = sphi 0, %s16
      %p13 = scmp.ge.s32.totalorder %s12, 10
      %s19 = sphi 0, %s38
      %s20 = sphi 0, %s34
      %s21 = sphi 0, %s30
      %s22 = sphi 0, %s19
      %s23 = sphi 0, %s20
      %s24 = sphi 0, %s21
      %s25 = sphi 0, %s22
      %s26 = sphi 0, %s23
      %s27 = sphi 0, %s24
      %s47 = sphi 0, %s49
      %s50 = sphi 0, %s47
      %s51 = sphi 0, %s50
      %s67 = sphi 0, %s51
      %s71 = sphi 0, %s71
      %s73 = sphi 0, %s71
      %s74 = sphi 0, %s73
      %s88 = sphi 0, %s74
      %s94 = sphi 0, %s96
      %s97 = sphi 0, %s94
      %s98 = sphi 0, %s97
      %s114 = sphi 0, %s98
      %s124 = sphi 0, %s126
      %s127 = sphi 0, %s124
      %s128 = sphi 0, %s127
      %s144 = sphi 0, %s128
    $region4: #{tpu_custom_call.1} parent=1 // loop_header_branch
      %15 = sbr.rel (%p13) target = $region8
    $region5: #{tpu_custom_call.1} parent=1 // loop_body
      %s17 = ssub.s32 %s12, 1
      %s18 = ssub.s32 %s12, 2
      %s28 = sadd.s32 1, %s21
      %p29 = scmp.ge.s32.totalorder %s28, 2
      %s30 = scalar_select %p29, 0, %s28
      %s31 = sadd.s32 1, %s20
      %s32 = scalar_select %p29, %s31, %s20
      %p33 = scmp.ge.s32.totalorder %s32, 2
      %s34 = scalar_select %p33, 0, %s32
      %s35 = sadd.s32 1, %s19
      %s36 = scalar_select %p33, %s35, %s19
      %p37 = scmp.ge.s32.totalorder %s36, 2
      %s38 = scalar_select %p37, 0, %s36
      %s39 = smul.u32 %s19, 3
      %s40 = sadd.s32 %s39, %s20
      %s41 = sadd.s32 %s40, %s21
      %s42 = smul.u32 %s38, 3
      %s43 = sadd.s32 %s42, %s34
      %s44 = sadd.s32 %s43, %s30
      %s45 = ssub.s32 %s41, %s44
      %p46 = scmp.eq.s32.totalorder %s45, 0
      %s48 = sadd.s32 %s47, 1
      %s49 = scalar_select %p46, %s47, %s48
      %p52 = pneg %p46
      %p53 = scmp.eq.s32.totalorder %s12, 7
      %p54 = por %p52, %p53
      %p55 = scmp.ne.s32.totalorder %s47, %s50
      %p56 = scmp.eq.s32.totalorder %s12, 0
      %p57 = por %p55, %p56
      %p58 = scmp.ne.s32.totalorder %s47, %s50
      %p59 = scmp.eq.s32.totalorder %s17, 7
      %p60 = por %p58, %p59
      %p61 = scmp.ne.s32.totalorder %s50, %s51
      %p62 = scmp.eq.s32.totalorder %s17, 0
      %p63 = por %p61, %p62
      %p64 = scmp.ne.s32.totalorder %s50, %s51
      %p65 = scmp.eq.s32.totalorder %s18, 7
      %p66 = por %p64, %p65
      %p68 = scmp.ne.s32.totalorder %s51, %s67
      %p69 = scmp.eq.s32.totalorder %s18, 0
      %p70 = por %p68, %p69
      %s72 = sadd.s32 %s71, 1
      %p75 = scmp.eq.s32.totalorder %s12, 7
      %p76 = scmp.ne.s32.totalorder %s71, %s73
      %p77 = scmp.eq.s32.totalorder %s12, 0
      %p78 = por %p76, %p77
      %p79 = scmp.ne.s32.totalorder %s71, %s73
      %p80 = scmp.eq.s32.totalorder %s17, 7
      %p81 = por %p79, %p80
      %p82 = scmp.ne.s32.totalorder %s73, %s74
      %p83 = scmp.eq.s32.totalorder %s17, 0
      %p84 = por %p82, %p83
      %p85 = scmp.ne.s32.totalorder %s73, %s74
      %p86 = scmp.eq.s32.totalorder %s18, 7
      %p87 = por %p85, %p86
      %p89 = scmp.ne.s32.totalorder %s74, %s88
      %p90 = scmp.eq.s32.totalorder %s18, 0
      %p91 = por %p89, %p90
      %s92 = ssub.s32 %s20, %s34
      %p93 = scmp.eq.s32.totalorder %s92, 0
      %s95 = sadd.s32 %s94, 1
      %s96 = scalar_select %p93, %s94, %s95
      %p99 = pneg %p93
      %p100 = scmp.eq.s32.totalorder %s12, 7
      %p101 = por %p99, %p100
      %p102 = scmp.ne.s32.totalorder %s94, %s97
      %p103 = scmp.eq.s32.totalorder %s12, 0
      %p104 = por %p102, %p103
      %p105 = scmp.ne.s32.totalorder %s94, %s97
      %p106 = scmp.eq.s32.totalorder %s17, 7
      %p107 = por %p105, %p106
      %p108 = scmp.ne.s32.totalorder %s97, %s98
      %p109 = scmp.eq.s32.totalorder %s17, 0
      %p110 = por %p108, %p109
      %p111 = scmp.ne.s32.totalorder %s97, %s98
      %p112 = scmp.eq.s32.totalorder %s18, 7
      %p113 = por %p111, %p112
      %p115 = scmp.ne.s32.totalorder %s98, %s114
      %p116 = scmp.eq.s32.totalorder %s18, 0
      %p117 = por %p115, %p116
      %s118 = smul.u32 %s19, 2
      %s119 = sadd.s32 %s118, %s20
      %s120 = smul.u32 %s38, 2
      %s121 = sadd.s32 %s120, %s34
      %s122 = ssub.s32 %s119, %s121
      %p123 = scmp.eq.s32.totalorder %s122, 0
      %s125 = sadd.s32 %s124, 1
      %s126 = scalar_select %p123, %s124, %s125
      %p129 = pneg %p123
      %p130 = scmp.eq.s32.totalorder %s12, 7
      %p131 = por %p129, %p130
      %p132 = scmp.ne.s32.totalorder %s124, %s127
      %p133 = scmp.eq.s32.totalorder %s12, 0
      %p134 = por %p132, %p133
      %p135 = scmp.ne.s32.totalorder %s124, %s127
      %p136 = scmp.eq.s32.totalorder %s17, 7
      %p137 = por %p135, %p136
      %p138 = scmp.ne.s32.totalorder %s127, %s128
      %p139 = scmp.eq.s32.totalorder %s17, 0
      %p140 = por %p138, %p139
      %p141 = scmp.ne.s32.totalorder %s127, %s128
      %p142 = scmp.eq.s32.totalorder %s18, 7
      %p143 = por %p141, %p142
      %p145 = scmp.ne.s32.totalorder %s128, %s144
      %p146 = scmp.eq.s32.totalorder %s18, 0
      %p147 = por %p145, %p146
      %p148 = scmp.le.s32.totalorder 1, %s12
      %p149 = scmp.lt.s32.totalorder %s12, 9
      %p150 = pnand %p148, %p149
      %p151 = pneg %p150
      // Predicated region
      $region9: #{tpu_custom_call.1} parent=5 // pred_check
        _
      $region10: #{tpu_custom_call.1} parent=5 // pred_check_branch
        %153 = sbr.rel (%p150) target = $region12
      $region11: #{tpu_custom_call.1} parent=5 // pred_region
        %s154 = ssub.s32 %s12, 1
        // Predicated region
        $region13: #{tpu_custom_call.1} parent=11 // pred_check
          %p155 = pneg %p84
        $region14: #{tpu_custom_call.1} parent=11 // pred_check_branch
          %157 = sbr.rel (%p155) target = $region16
        $region15: #{tpu_custom_call.1} parent=11 // pred_region
          _
        $region16: #{tpu_custom_call.1} parent=11 // pred_fallthru
          _
      $region12: #{tpu_custom_call.1} parent=5 // pred_fallthru
        _
      %p158 = scmp.lt.s32.totalorder %s12, 8
      // Predicated region
      $region17: #{tpu_custom_call.1} parent=5 // pred_check
        %p159 = pneg %p158
      $region18: #{tpu_custom_call.1} parent=5 // pred_check_branch
        %161 = sbr.rel (%p159) target = $region20
      $region19: #{tpu_custom_call.1} parent=5 // pred_region
        // Predicated region
        $region21: #{tpu_custom_call.1} parent=19 // pred_check
          %p162 = pneg %p57
        $region22: #{tpu_custom_call.1} parent=19 // pred_check_branch
          %164 = sbr.rel (%p162) target = $region24
        $region23: #{tpu_custom_call.1} parent=19 // pred_region
          %s165 = smul.u32 %s19, 3
          %s166 = sadd.s32 %s165, %s20
          %s167 = sadd.s32 %s166, %s21
          %p168 = scmp.lt.s32.totalorder %s167, 5
          %s169 = scalar_select %p168, %s167, 5
          %s170 = smul.addr %s169, 20
          %s171 = smul.addr %s170, 4
          %s172 = scalar_lea.vmem %s0, %s171
          %s173 = smul.u32 %s19, 3
          %s174 = sadd.s32 %s173, %s20
          %s175 = sadd.s32 %s174, %s21
        $region24: #{tpu_custom_call.1} parent=19 // pred_fallthru
          _
        // Predicated region
        $region25: #{tpu_custom_call.1} parent=19 // pred_check
          %p176 = pneg %p104
        $region26: #{tpu_custom_call.1} parent=19 // pred_check_branch
          %178 = sbr.rel (%p176) target = $region28
        $region27: #{tpu_custom_call.1} parent=19 // pred_region
          %p179 = scmp.lt.s32.totalorder %s20, 1
          %s180 = scalar_select %p179, %s20, 1
          %s181 = scalar_lea.vmem %s2, %s180
        $region28: #{tpu_custom_call.1} parent=19 // pred_fallthru
          _
      $region20: #{tpu_custom_call.1} parent=5 // pred_fallthru
        _
      %p182 = scmp.le.s32.totalorder 1, %s12
      %p183 = scmp.lt.s32.totalorder %s12, 9
      %p184 = pnand %p182, %p183
      %p185 = pneg %p184
      // Predicated region
      $region29: #{tpu_custom_call.1} parent=5 // pred_check
        _
      $region30: #{tpu_custom_call.1} parent=5 // pred_check_branch
        %187 = sbr.rel (%p184) target = $region32
      $region31: #{tpu_custom_call.1} parent=5 // pred_region
        %s188 = ssub.s32 %s12, 1
        %s189 = smul.u32 %s22, 3
        %s190 = sadd.s32 %s189, %s23
        %s191 = sadd.s32 %s190, %s24
        %p192 = scmp.lt.s32.totalorder %s191, 5
        %s193 = scalar_select %p192, %s191, 5
        %s194 = smul.addr %s193, 20
        %s195 = smul.addr %s194, 4
        %s196 = scalar_lea.vmem %s0, %s195
        %p197 = pneg %p63
        %p198 = pneg %p60
        %p199 = pneg %p84
        %p200 = pneg %p81
        %p201 = scmp.lt.s32.totalorder %s23, 1
        %s202 = scalar_select %p201, %s23, 1
        %s203 = scalar_lea.vmem %s2, %s202
        %p204 = pneg %p110
        %p205 = pneg %p107
        %p206 = pneg %p140
        %p207 = pneg %p137
        %s208 = sand.u32 %s127, 1
        %s209 = scalar_lea.sflag [#allocation4], %s208
        %s210 = sand.u32 %s127, 1
        %s211 = smul.addr %s210, 64
        %s212 = scalar_lea.vmem [#allocation3], %s211
        %s213 = smul.u32 %s22, 3
        %s214 = sadd.s32 %s213, %s23
        %s215 = sadd.s32 %s214, %s24
        %p216 = scmp.lt.s32.totalorder %s215, 5
        %s217 = scalar_select %p216, %s215, 5
        %s218 = smul.addr %s217, 20
        %s219 = smul.addr %s218, 4
        %s220 = scalar_lea.vmem %s0, %s219
        %s221 = smul.u32 %s22, 3
        %s222 = sadd.s32 %s221, %s23
        %s223 = sadd.s32 %s222, %s24
        %p224 = scmp.lt.s32.totalorder %s23, 1
        %s225 = scalar_select %p224, %s23, 1
        %s226 = scalar_lea.vmem %s2, %s225
        %s227 = smul.u32 %s22, 2
        %s228 = sadd.s32 %s227, %s23
        %p230 = scmp.eq.s32.totalorder %s24, 0
        // Predicated region
        $region33: #{tpu_custom_call.1} parent=31 // pred_check
          %p231 = pneg %p230
        $region34: #{tpu_custom_call.1} parent=31 // pred_check_branch
          %233 = sbr.rel (%p231) target = $region36
        $region35: #{tpu_custom_call.1} parent=31 // pred_region
          %234 = vst [vmem:[#allocation2] sm:$0xff] 0.0
          %235 = vst [vmem:[#allocation2 + $0x8] sm:$0xff] 0.0
          %236 = vst [vmem:[#allocation2 + $0x10] sm:$0xff] 0.0
          %237 = vst [vmem:[#allocation2 + $0x18] sm:$0xff] 0.0
          %238 = vst [vmem:[#allocation2 + $0x20] sm:$0xff] 0.0
          %239 = vst [vmem:[#allocation2 + $0x28] sm:$0xff] 0.0
          %240 = vst [vmem:[#allocation2 + $0x30] sm:$0xff] 0.0
          %241 = vst [vmem:[#allocation2 + $0x38] sm:$0xff] 0.0
        $region36: #{tpu_custom_call.1} parent=31 // pred_fallthru
          _
        %v242 = vld [vmem:[#allocation2] sm:$0xff]
        %v243 = vld [vmem:[#allocation2 + $0x8] sm:$0xff]
        %v244 = vld [vmem:[#allocation2 + $0x10] sm:$0xff]
        %v245 = vld [vmem:[#allocation2 + $0x18] sm:$0xff]
        %v246 = vld [vmem:[#allocation2 + $0x20] sm:$0xff]
        %v247 = vld [vmem:[#allocation2 + $0x28] sm:$0xff]
        %v248 = vld [vmem:[#allocation2 + $0x30] sm:$0xff]
        %v249 = vld [vmem:[#allocation2 + $0x38] sm:$0xff]
        %v250 = vld [vmem:[%s220] sm:$0xf]
        %v251 = vld [vmem:[%s220 + $0x8] sm:$0xf]
        %v252 = vld [vmem:[%s220 + $0x10] sm:$0xf]
        %v253 = vld [vmem:[%s220 + $0x18] sm:$0xf]
        %v254 = vld [vmem:[%s220 + $0x20] sm:$0xf]
        %v255 = vld [vmem:[%s220 + $0x28] sm:$0xf]
        %v256 = vld [vmem:[%s220 + $0x30] sm:$0xf]
        %v257 = vld [vmem:[%s220 + $0x38] sm:$0xf]
        %s258 = smul.u32 %s24, 9
        %s259 = smul.addr %s258, 2
        %s260 = scalar_lea.vmem %s1, %s259
        %v261 = vld [vmem:[%s260] sm:$0x3]
        %v270 = vunpack.c.l.b16 %v250
        %v271 = vunpack.c.l.b16 %v251
        %v272 = vunpack.c.l.b16 %v252
        %v273 = vunpack.c.l.b16 %v253
        %v274 = vunpack.c.l.b16 %v254
        %v275 = vunpack.c.l.b16 %v255
        %v276 = vunpack.c.l.b16 %v256
        %v277 = vunpack.c.l.b16 %v257
        %v278 = vpack.c.b16 %v271, %v270
        %v279 = vpack.c.b16 %v273, %v272
        %v280 = vpack.c.b16 %v275, %v274
        %v281 = vpack.c.b16 %v277, %v276
        %vm282 = vcmask 31744
        %v284 = vsel %vm282, %v278, 0
        %v287 = vsel %vm282, %v279, 0
        %v290 = vsel %vm282, %v280, 0
        %v293 = vsel %vm282, %v281, 0
        %vm295 = vcmask 1041408
        %v297 = vsel %vm295, %v261, 0
        %299 = vmatprep.subr.bf16.mxu0 0
        %300 = vmatpush1.bf16.msra.mxu0 0
        %301 = vmatprep.subr.bf16.mxu0 0
        %302 = vmatpush1.bf16.msra.mxu0 0
        %303 = vmatprep.subr.bf16.mxu0 0
        %304 = vmatpush1.bf16.msra.mxu0 0
        %305 = vmatprep.subr.bf16.mxu0 0
        %306 = vmatpush1.bf16.msra.mxu0 0
        %307 = vmatprep.subr.bf16.mxu0 0
        %308 = vmatpush1.bf16.msra.mxu0 0
        %309 = vmatprep.subr.bf16.mxu0 0
        %310 = vmatpush1.bf16.msra.mxu0 0
        %311 = vmatprep.subr.bf16.mxu0 0
        %312 = vmatpush1.bf16.msra.mxu0 0
        %313 = vmatprep.subr.bf16.mxu0 0
        %314 = vmatpush1.bf16.msra.mxu0 %v297
        %315 = vmatprep.subr.bf16.mxu0 0
        %316 = vmatpush2.bf16.msra.mxu0 0
        %317 = vmatprep.subr.bf16.mxu0 0
        %318 = vmatpush2.bf16.msra.mxu0 0
        %319 = vmatprep.subr.bf16.mxu0 0
        %320 = vmatpush2.bf16.msra.mxu0 0
        %321 = vmatprep.subr.bf16.mxu0 0
        %322 = vmatpush2.bf16.msra.mxu0 0
        %323 = vmatprep.subr.bf16.mxu0 0
        %324 = vmatpush2.bf16.msra.mxu0 0
        %325 = vmatprep.subr.bf16.mxu0 0
        %326 = vmatpush2.bf16.msra.mxu0 0
        %327 = vmatprep.subr.bf16.mxu0 0
        %328 = vmatpush2.bf16.msra.mxu0 0
        %329 = vmatprep.subr.bf16.mxu0 0
        %330 = vmatpush2.bf16.msra.mxu0 0
        %331 = vmatprep.mubr.bf16.mxu0 0
        %332 = vmatmul.mubr.bf16.gmra.mxu0 %v284
        %v333 = vpop.f32.mrf.mxu0
        %v334 = vadd.f32 0.0, %v333
        %v335 = vpop.f32.mrf.mxu0
        %v336 = vpop.f32.mrf.mxu0
        %v337 = vadd.f32 0.0, %v336
        %v338 = vpop.f32.mrf.mxu0
        %339 = vmatprep.mubr.bf16.mxu0 0
        %340 = vmatmul.mubr.bf16.gmra.mxu0 %v287
        %v341 = vpop.f32.mrf.mxu0
        %v342 = vadd.f32 0.0, %v341
        %v343 = vpop.f32.mrf.mxu0
        %v344 = vpop.f32.mrf.mxu0
        %v345 = vadd.f32 0.0, %v344
        %v346 = vpop.f32.mrf.mxu0
        %347 = vmatprep.mubr.bf16.mxu0 0
        %348 = vmatmul.mubr.bf16.gmra.mxu0 %v290
        %v349 = vpop.f32.mrf.mxu0
        %v350 = vadd.f32 0.0, %v349
        %v351 = vpop.f32.mrf.mxu0
        %v352 = vpop.f32.mrf.mxu0
        %v353 = vadd.f32 0.0, %v352
        %v354 = vpop.f32.mrf.mxu0
        %355 = vmatprep.mubr.bf16.mxu0 0
        %356 = vmatmul.mubr.bf16.gmra.mxu0 %v293
        %v357 = vpop.f32.mrf.mxu0
        %v358 = vadd.f32 0.0, %v357
        %v359 = vpop.f32.mrf.mxu0
        %v360 = vpop.f32.mrf.mxu0
        %v361 = vadd.f32 0.0, %v360
        %v362 = vpop.f32.mrf.mxu0
        %363 = vdwg.mxu0
        %v364 = vadd.f32 %v242, %v334
        %v365 = vadd.f32 %v243, %v337
        %v366 = vadd.f32 %v244, %v342
        %v367 = vadd.f32 %v245, %v345
        %v368 = vadd.f32 %v246, %v350
        %v369 = vadd.f32 %v247, %v353
        %v370 = vadd.f32 %v248, %v358
        %v371 = vadd.f32 %v249, %v361
        %v372 = vld [vmem:[%s220] sm:$0xf]
        %v373 = vld [vmem:[%s220 + $0x4] sm:$0x1]
        %v374 = vld [vmem:[%s220 + $0x8] sm:$0xf]
        %v375 = vld [vmem:[%s220 + $0xc] sm:$0x1]
        %v376 = vld [vmem:[%s220 + $0x10] sm:$0xf]
        %v377 = vld [vmem:[%s220 + $0x14] sm:$0x1]
        %v378 = vld [vmem:[%s220 + $0x18] sm:$0xf]
        %v379 = vld [vmem:[%s220 + $0x1c] sm:$0x1]
        %v380 = vld [vmem:[%s220 + $0x20] sm:$0xf]
        %v381 = vld [vmem:[%s220 + $0x24] sm:$0x1]
        %v382 = vld [vmem:[%s220 + $0x28] sm:$0xf]
        %v383 = vld [vmem:[%s220 + $0x2c] sm:$0x1]
        %v384 = vld [vmem:[%s220 + $0x30] sm:$0xf]
        %v385 = vld [vmem:[%s220 + $0x34] sm:$0x1]
        %v386 = vld [vmem:[%s220 + $0x38] sm:$0xf]
        %v387 = vld [vmem:[%s220 + $0x3c] sm:$0x1]
        %vm388 = vsmask.f32 3328
        %vm389 = vsmask.f32 7440
        %vm390 = vmor %vm388, %vm389
        %v392 = vshrl.u32 %v372, 16
        %v394 = vrot.slane %v392, 4
        %v395 = vshll.u32 %v372, 16
        %v397 = vrot.slane %v395, 5
        %v398 = vor.u32 %v394, %v397
        %v399 = vrot.slane %v398, 4
        %v401 = vshll.u32 %v373, 16
        %v403 = vrot.slane %v401, 5
        %v404 = vsel %vm390, %v399, %v403
        %v406 = vshrl.u32 %v374, 16
        %v408 = vrot.slane %v406, 4
        %v409 = vshll.u32 %v374, 16
        %v411 = vrot.slane %v409, 5
        %v412 = vor.u32 %v408, %v411
        %v413 = vrot.slane %v412, 4
        %v415 = vshll.u32 %v375, 16
        %v417 = vrot.slane %v415, 5
        %v418 = vsel %vm390, %v413, %v417
        %v420 = vshrl.u32 %v376, 16
        %v422 = vrot.slane %v420, 4
        %v423 = vshll.u32 %v376, 16
        %v425 = vrot.slane %v423, 5
        %v426 = vor.u32 %v422, %v425
        %v427 = vrot.slane %v426, 4
        %v429 = vshll.u32 %v377, 16
        %v431 = vrot.slane %v429, 5
        %v432 = vsel %vm390, %v427, %v431
        %v434 = vshrl.u32 %v378, 16
        %v436 = vrot.slane %v434, 4
        %v437 = vshll.u32 %v378, 16
        %v439 = vrot.slane %v437, 5
        %v440 = vor.u32 %v436, %v439
        %v441 = vrot.slane %v440, 4
        %v443 = vshll.u32 %v379, 16
        %v445 = vrot.slane %v443, 5
        %v446 = vsel %vm390, %v441, %v445
        %v448 = vshrl.u32 %v380, 16
        %v450 = vrot.slane %v448, 4
        %v451 = vshll.u32 %v380, 16
        %v453 = vrot.slane %v451, 5
        %v454 = vor.u32 %v450, %v453
        %v455 = vrot.slane %v454, 4
        %v457 = vshll.u32 %v381, 16
        %v459 = vrot.slane %v457, 5
        %v460 = vsel %vm390, %v455, %v459
        %v462 = vshrl.u32 %v382, 16
        %v464 = vrot.slane %v462, 4
        %v465 = vshll.u32 %v382, 16
        %v467 = vrot.slane %v465, 5
        %v468 = vor.u32 %v464, %v467
        %v469 = vrot.slane %v468, 4
        %v471 = vshll.u32 %v383, 16
        %v473 = vrot.slane %v471, 5
        %v474 = vsel %vm390, %v469, %v473
        %v476 = vshrl.u32 %v384, 16
        %v478 = vrot.slane %v476, 4
        %v479 = vshll.u32 %v384, 16
        %v481 = vrot.slane %v479, 5
        %v482 = vor.u32 %v478, %v481
        %v483 = vrot.slane %v482, 4
        %v485 = vshll.u32 %v385, 16
        %v487 = vrot.slane %v485, 5
        %v488 = vsel %vm390, %v483, %v487
        %v490 = vshrl.u32 %v386, 16
        %v492 = vrot.slane %v490, 4
        %v493 = vshll.u32 %v386, 16
        %v495 = vrot.slane %v493, 5
        %v496 = vor.u32 %v492, %v495
        %v497 = vrot.slane %v496, 4
        %v499 = vshll.u32 %v387, 16
        %v501 = vrot.slane %v499, 5
        %v502 = vsel %vm390, %v497, %v501
        %s503 = sadd.s32 %s258, 1
        %s504 = smul.addr %s503, 2
        %s505 = scalar_lea.vmem %s1, %s504
        %v506 = vld [vmem:[%s505] sm:$0x3]
        %v507 = vunpack.c.l.b16 %v404
        %v508 = vunpack.c.l.b16 %v418
        %v509 = vunpack.c.l.b16 %v432
        %v510 = vunpack.c.l.b16 %v446
        %v511 = vunpack.c.l.b16 %v460
        %v512 = vunpack.c.l.b16 %v474
        %v513 = vunpack.c.l.b16 %v488
        %v514 = vunpack.c.l.b16 %v502
        %v515 = vpack.c.b16 %v508, %v507
        %v516 = vpack.c.b16 %v510, %v509
        %v517 = vpack.c.b16 %v512, %v511
        %v518 = vpack.c.b16 %v514, %v513
        %v520 = vsel %vm282, %v515, 0
        %v523 = vsel %vm282, %v516, 0
        %v526 = vsel %vm282, %v517, 0
        %v529 = vsel %vm282, %v518, 0
        %v532 = vsel %vm295, %v506, 0
        %534 = vmatprep.subr.bf16.mxu0 0
        %535 = vmatpush1.bf16.msra.mxu0 0
        %536 = vmatprep.subr.bf16.mxu0 0
        %537 = vmatpush1.bf16.msra.mxu0 0
        %538 = vmatprep.subr.bf16.mxu0 0
        %539 = vmatpush1.bf16.msra.mxu0 0
        %540 = vmatprep.subr.bf16.mxu0 0
        %541 = vmatpush1.bf16.msra.mxu0 0
        %542 = vmatprep.subr.bf16.mxu0 0
        %543 = vmatpush1.bf16.msra.mxu0 0
        %544 = vmatprep.subr.bf16.mxu0 0
        %545 = vmatpush1.bf16.msra.mxu0 0
        %546 = vmatprep.subr.bf16.mxu0 0
        %547 = vmatpush1.bf16.msra.mxu0 0
        %548 = vmatprep.subr.bf16.mxu0 0
        %549 = vmatpush1.bf16.msra.mxu0 %v532
        %550 = vmatprep.subr.bf16.mxu0 0
        %551 = vmatpush2.bf16.msra.mxu0 0
        %552 = vmatprep.subr.bf16.mxu0 0
        %553 = vmatpush2.bf16.msra.mxu0 0
        %554 = vmatprep.subr.bf16.mxu0 0
        %555 = vmatpush2.bf16.msra.mxu0 0
        %556 = vmatprep.subr.bf16.mxu0 0
        %557 = vmatpush2.bf16.msra.mxu0 0
        %558 = vmatprep.subr.bf16.mxu0 0
        %559 = vmatpush2.bf16.msra.mxu0 0
        %560 = vmatprep.subr.bf16.mxu0 0
        %561 = vmatpush2.bf16.msra.mxu0 0
        %562 = vmatprep.subr.bf16.mxu0 0
        %563 = vmatpush2.bf16.msra.mxu0 0
        %564 = vmatprep.subr.bf16.mxu0 0
        %565 = vmatpush2.bf16.msra.mxu0 0
        %566 = vmatprep.mubr.bf16.mxu0 0
        %567 = vmatmul.mubr.bf16.gmra.mxu0 %v520
        %v568 = vpop.f32.mrf.mxu0
        %v569 = vadd.f32 0.0, %v568
        %v570 = vpop.f32.mrf.mxu0
        %v571 = vpop.f32.mrf.mxu0
        %v572 = vadd.f32 0.0, %v571
        %v573 = vpop.f32.mrf.mxu0
        %574 = vmatprep.mubr.bf16.mxu0 0
        %575 = vmatmul.mubr.bf16.gmra.mxu0 %v523
        %v576 = vpop.f32.mrf.mxu0
        %v577 = vadd.f32 0.0, %v576
        %v578 = vpop.f32.mrf.mxu0
        %v579 = vpop.f32.mrf.mxu0
        %v580 = vadd.f32 0.0, %v579
        %v581 = vpop.f32.mrf.mxu0
        %582 = vmatprep.mubr.bf16.mxu0 0
        %583 = vmatmul.mubr.bf16.gmra.mxu0 %v526
        %v584 = vpop.f32.mrf.mxu0
        %v585 = vadd.f32 0.0, %v584
        %v586 = vpop.f32.mrf.mxu0
        %v587 = vpop.f32.mrf.mxu0
        %v588 = vadd.f32 0.0, %v587
        %v589 = vpop.f32.mrf.mxu0
        %590 = vmatprep.mubr.bf16.mxu0 0
        %591 = vmatmul.mubr.bf16.gmra.mxu0 %v529
        %v592 = vpop.f32.mrf.mxu0
        %v593 = vadd.f32 0.0, %v592
        %v594 = vpop.f32.mrf.mxu0
        %v595 = vpop.f32.mrf.mxu0
        %v596 = vadd.f32 0.0, %v595
        %v597 = vpop.f32.mrf.mxu0
        %598 = vdwg.mxu0
        %v599 = vadd.f32 %v364, %v569
        %v600 = vadd.f32 %v365, %v572
        %v601 = vadd.f32 %v366, %v577
        %v602 = vadd.f32 %v367, %v580
        %v603 = vadd.f32 %v368, %v585
        %v604 = vadd.f32 %v369, %v588
        %v605 = vadd.f32 %v370, %v593
        %v606 = vadd.f32 %v371, %v596
        %v607 = vld [vmem:[%s220] sm:$0xe]
        %v608 = vld [vmem:[%s220 + $0x8] sm:$0xe]
        %v609 = vld [vmem:[%s220 + $0x10] sm:$0xe]
        %v610 = vld [vmem:[%s220 + $0x18] sm:$0xe]
        %v611 = vld [vmem:[%s220 + $0x20] sm:$0xe]
        %v612 = vld [vmem:[%s220 + $0x28] sm:$0xe]
        %v613 = vld [vmem:[%s220 + $0x30] sm:$0xe]
        %v614 = vld [vmem:[%s220 + $0x38] sm:$0xe]
        %vm631 = vcmask 1042432
        %vm632 = vcmask 1046532
        %vm633 = vmor %vm631, %vm632
        %v634 = vrot.slane %v607, 5
        %v635 = vrot.slane %v634, 4
        %v636 = vrot.slane %v373, 5
        %v637 = vsel %vm633, %v635, %v636
        %v638 = vrot.slane %v608, 5
        %v639 = vrot.slane %v638, 4
        %v640 = vrot.slane %v375, 5
        %v641 = vsel %vm633, %v639, %v640
        %v642 = vrot.slane %v609, 5
        %v643 = vrot.slane %v642, 4
        %v644 = vrot.slane %v377, 5
        %v645 = vsel %vm633, %v643, %v644
        %v646 = vrot.slane %v610, 5
        %v647 = vrot.slane %v646, 4
        %v648 = vrot.slane %v379, 5
        %v649 = vsel %vm633, %v647, %v648
        %v650 = vrot.slane %v611, 5
        %v651 = vrot.slane %v650, 4
        %v652 = vrot.slane %v381, 5
        %v653 = vsel %vm633, %v651, %v652
        %v654 = vrot.slane %v612, 5
        %v655 = vrot.slane %v654, 4
        %v656 = vrot.slane %v383, 5
        %v657 = vsel %vm633, %v655, %v656
        %v658 = vrot.slane %v613, 5
        %v659 = vrot.slane %v658, 4
        %v660 = vrot.slane %v385, 5
        %v661 = vsel %vm633, %v659, %v660
        %v662 = vrot.slane %v614, 5
        %v663 = vrot.slane %v662, 4
        %v664 = vrot.slane %v387, 5
        %v665 = vsel %vm633, %v663, %v664
        %s666 = sadd.s32 %s258, 2
        %s667 = smul.addr %s666, 2
        %s668 = scalar_lea.vmem %s1, %s667
        %v669 = vld [vmem:[%s668] sm:$0x3]
        %v670 = vunpack.c.l.b16 %v637
        %v671 = vunpack.c.l.b16 %v641
        %v672 = vunpack.c.l.b16 %v645
        %v673 = vunpack.c.l.b16 %v649
        %v674 = vunpack.c.l.b16 %v653
        %v675 = vunpack.c.l.b16 %v657
        %v676 = vunpack.c.l.b16 %v661
        %v677 = vunpack.c.l.b16 %v665
        %v678 = vpack.c.b16 %v671, %v670
        %v679 = vpack.c.b16 %v673, %v672
        %v680 = vpack.c.b16 %v675, %v674
        %v681 = vpack.c.b16 %v677, %v676
        %v683 = vsel %vm282, %v678, 0
        %v686 = vsel %vm282, %v679, 0
        %v689 = vsel %vm282, %v680, 0
        %v692 = vsel %vm282, %v681, 0
        %v695 = vsel %vm295, %v669, 0
        %697 = vmatprep.subr.bf16.mxu0 0
        %698 = vmatpush1.bf16.msra.mxu0 0
        %699 = vmatprep.subr.bf16.mxu0 0
        %700 = vmatpush1.bf16.msra.mxu0 0
        %701 = vmatprep.subr.bf16.mxu0 0
        %702 = vmatpush1.bf16.msra.mxu0 0
        %703 = vmatprep.subr.bf16.mxu0 0
        %704 = vmatpush1.bf16.msra.mxu0 0
        %705 = vmatprep.subr.bf16.mxu0 0
        %706 = vmatpush1.bf16.msra.mxu0 0
        %707 = vmatprep.subr.bf16.mxu0 0
        %708 = vmatpush1.bf16.msra.mxu0 0
        %709 = vmatprep.subr.bf16.mxu0 0
        %710 = vmatpush1.bf16.msra.mxu0 0
        %711 = vmatprep.subr.bf16.mxu0 0
        %712 = vmatpush1.bf16.msra.mxu0 %v695
        %713 = vmatprep.subr.bf16.mxu0 0
        %714 = vmatpush2.bf16.msra.mxu0 0
        %715 = vmatprep.subr.bf16.mxu0 0
        %716 = vmatpush2.bf16.msra.mxu0 0
        %717 = vmatprep.subr.bf16.mxu0 0
        %718 = vmatpush2.bf16.msra.mxu0 0
        %719 = vmatprep.subr.bf16.mxu0 0
        %720 = vmatpush2.bf16.msra.mxu0 0
        %721 = vmatprep.subr.bf16.mxu0 0
        %722 = vmatpush2.bf16.msra.mxu0 0
        %723 = vmatprep.subr.bf16.mxu0 0
        %724 = vmatpush2.bf16.msra.mxu0 0
        %725 = vmatprep.subr.bf16.mxu0 0
        %726 = vmatpush2.bf16.msra.mxu0 0
        %727 = vmatprep.subr.bf16.mxu0 0
        %728 = vmatpush2.bf16.msra.mxu0 0
        %729 = vmatprep.mubr.bf16.mxu0 0
        %730 = vmatmul.mubr.bf16.gmra.mxu0 %v683
        %v731 = vpop.f32.mrf.mxu0
        %v732 = vadd.f32 0.0, %v731
        %v733 = vpop.f32.mrf.mxu0
        %v734 = vpop.f32.mrf.mxu0
        %v735 = vadd.f32 0.0, %v734
        %v736 = vpop.f32.mrf.mxu0
        %737 = vmatprep.mubr.bf16.mxu0 0
        %738 = vmatmul.mubr.bf16.gmra.mxu0 %v686
        %v739 = vpop.f32.mrf.mxu0
        %v740 = vadd.f32 0.0, %v739
        %v741 = vpop.f32.mrf.mxu0
        %v742 = vpop.f32.mrf.mxu0
        %v743 = vadd.f32 0.0, %v742
        %v744 = vpop.f32.mrf.mxu0
        %745 = vmatprep.mubr.bf16.mxu0 0
        %746 = vmatmul.mubr.bf16.gmra.mxu0 %v689
        %v747 = vpop.f32.mrf.mxu0
        %v748 = vadd.f32 0.0, %v747
        %v749 = vpop.f32.mrf.mxu0
        %v750 = vpop.f32.mrf.mxu0
        %v751 = vadd.f32 0.0, %v750
        %v752 = vpop.f32.mrf.mxu0
        %753 = vmatprep.mubr.bf16.mxu0 0
        %754 = vmatmul.mubr.bf16.gmra.mxu0 %v692
        %v755 = vpop.f32.mrf.mxu0
        %v756 = vadd.f32 0.0, %v755
        %v757 = vpop.f32.mrf.mxu0
        %v758 = vpop.f32.mrf.mxu0
        %v759 = vadd.f32 0.0, %v758
        %v760 = vpop.f32.mrf.mxu0
        %761 = vdwg.mxu0
        %v762 = vadd.f32 %v599, %v732
        %v763 = vadd.f32 %v600, %v735
        %v764 = vadd.f32 %v601, %v740
        %v765 = vadd.f32 %v602, %v743
        %v766 = vadd.f32 %v603, %v748
        %v767 = vadd.f32 %v604, %v751
        %v768 = vadd.f32 %v605, %v756
        %v769 = vadd.f32 %v606, %v759
        %s770 = scalar_lea.vmem %s220, 8
        %v771 = vld [vmem:[%s770] sm:$0xf]
        %v772 = vld [vmem:[%s770 + $0x8] sm:$0xf]
        %v773 = vld [vmem:[%s770 + $0x10] sm:$0xf]
        %v774 = vld [vmem:[%s770 + $0x18] sm:$0xf]
        %v775 = vld [vmem:[%s770 + $0x20] sm:$0xf]
        %v776 = vld [vmem:[%s770 + $0x28] sm:$0xf]
        %v777 = vld [vmem:[%s770 + $0x30] sm:$0xf]
        %v778 = vld [vmem:[%s770 + $0x38] sm:$0xf]
        %s779 = sadd.s32 %s258, 3
        %s780 = smul.addr %s779, 2
        %s781 = scalar_lea.vmem %s1, %s780
        %v782 = vld [vmem:[%s781] sm:$0x3]
        %v791 = vunpack.c.l.b16 %v771
        %v792 = vunpack.c.l.b16 %v772
        %v793 = vunpack.c.l.b16 %v773
        %v794 = vunpack.c.l.b16 %v774
        %v795 = vunpack.c.l.b16 %v775
        %v796 = vunpack.c.l.b16 %v776
        %v797 = vunpack.c.l.b16 %v777
        %v798 = vunpack.c.l.b16 %v778
        %v799 = vpack.c.b16 %v792, %v791
        %v800 = vpack.c.b16 %v794, %v793
        %v801 = vpack.c.b16 %v796, %v795
        %v802 = vpack.c.b16 %v798, %v797
        %v804 = vsel %vm282, %v799, 0
        %v807 = vsel %vm282, %v800, 0
        %v810 = vsel %vm282, %v801, 0
        %v813 = vsel %vm282, %v802, 0
        %v816 = vsel %vm295, %v782, 0
        %818 = vmatprep.subr.bf16.mxu0 0
        %819 = vmatpush1.bf16.msra.mxu0 0
        %820 = vmatprep.subr.bf16.mxu0 0
        %821 = vmatpush1.bf16.msra.mxu0 0
        %822 = vmatprep.subr.bf16.mxu0 0
        %823 = vmatpush1.bf16.msra.mxu0 0
        %824 = vmatprep.subr.bf16.mxu0 0
        %825 = vmatpush1.bf16.msra.mxu0 0
        %826 = vmatprep.subr.bf16.mxu0 0
        %827 = vmatpush1.bf16.msra.mxu0 0
        %828 = vmatprep.subr.bf16.mxu0 0
        %829 = vmatpush1.bf16.msra.mxu0 0
        %830 = vmatprep.subr.bf16.mxu0 0
        %831 = vmatpush1.bf16.msra.mxu0 0
        %832 = vmatprep.subr.bf16.mxu0 0
        %833 = vmatpush1.bf16.msra.mxu0 %v816
        %834 = vmatprep.subr.bf16.mxu0 0
        %835 = vmatpush2.bf16.msra.mxu0 0
        %836 = vmatprep.subr.bf16.mxu0 0
        %837 = vmatpush2.bf16.msra.mxu0 0
        %838 = vmatprep.subr.bf16.mxu0 0
        %839 = vmatpush2.bf16.msra.mxu0 0
        %840 = vmatprep.subr.bf16.mxu0 0
        %841 = vmatpush2.bf16.msra.mxu0 0
        %842 = vmatprep.subr.bf16.mxu0 0
        %843 = vmatpush2.bf16.msra.mxu0 0
        %844 = vmatprep.subr.bf16.mxu0 0
        %845 = vmatpush2.bf16.msra.mxu0 0
        %846 = vmatprep.subr.bf16.mxu0 0
        %847 = vmatpush2.bf16.msra.mxu0 0
        %848 = vmatprep.subr.bf16.mxu0 0
        %849 = vmatpush2.bf16.msra.mxu0 0
        %850 = vmatprep.mubr.bf16.mxu0 0
        %851 = vmatmul.mubr.bf16.gmra.mxu0 %v804
        %v852 = vpop.f32.mrf.mxu0
        %v853 = vadd.f32 0.0, %v852
        %v854 = vpop.f32.mrf.mxu0
        %v855 = vpop.f32.mrf.mxu0
        %v856 = vadd.f32 0.0, %v855
        %v857 = vpop.f32.mrf.mxu0
        %858 = vmatprep.mubr.bf16.mxu0 0
        %859 = vmatmul.mubr.bf16.gmra.mxu0 %v807
        %v860 = vpop.f32.mrf.mxu0
        %v861 = vadd.f32 0.0, %v860
        %v862 = vpop.f32.mrf.mxu0
        %v863 = vpop.f32.mrf.mxu0
        %v864 = vadd.f32 0.0, %v863
        %v865 = vpop.f32.mrf.mxu0
        %866 = vmatprep.mubr.bf16.mxu0 0
        %867 = vmatmul.mubr.bf16.gmra.mxu0 %v810
        %v868 = vpop.f32.mrf.mxu0
        %v869 = vadd.f32 0.0, %v868
        %v870 = vpop.f32.mrf.mxu0
        %v871 = vpop.f32.mrf.mxu0
        %v872 = vadd.f32 0.0, %v871
        %v873 = vpop.f32.mrf.mxu0
        %874 = vmatprep.mubr.bf16.mxu0 0
        %875 = vmatmul.mubr.bf16.gmra.mxu0 %v813
        %v876 = vpop.f32.mrf.mxu0
        %v877 = vadd.f32 0.0, %v876
        %v878 = vpop.f32.mrf.mxu0
        %v879 = vpop.f32.mrf.mxu0
        %v880 = vadd.f32 0.0, %v879
        %v881 = vpop.f32.mrf.mxu0
        %882 = vdwg.mxu0
        %v883 = vadd.f32 %v762, %v853
        %v884 = vadd.f32 %v763, %v856
        %v885 = vadd.f32 %v764, %v861
        %v886 = vadd.f32 %v765, %v864
        %v887 = vadd.f32 %v766, %v869
        %v888 = vadd.f32 %v767, %v872
        %v889 = vadd.f32 %v768, %v877
        %v890 = vadd.f32 %v769, %v880
        %v891 = vld [vmem:[%s770] sm:$0xf]
        %v892 = vld [vmem:[%s770 + $0x4] sm:$0x1]
        %v893 = vld [vmem:[%s770 + $0x8] sm:$0xf]
        %v894 = vld [vmem:[%s770 + $0xc] sm:$0x1]
        %v895 = vld [vmem:[%s770 + $0x10] sm:$0xf]
        %v896 = vld [vmem:[%s770 + $0x14] sm:$0x1]
        %v897 = vld [vmem:[%s770 + $0x18] sm:$0xf]
        %v898 = vld [vmem:[%s770 + $0x1c] sm:$0x1]
        %v899 = vld [vmem:[%s770 + $0x20] sm:$0xf]
        %v900 = vld [vmem:[%s770 + $0x24] sm:$0x1]
        %v901 = vld [vmem:[%s770 + $0x28] sm:$0xf]
        %v902 = vld [vmem:[%s770 + $0x2c] sm:$0x1]
        %v903 = vld [vmem:[%s770 + $0x30] sm:$0xf]
        %v904 = vld [vmem:[%s770 + $0x34] sm:$0x1]
        %v905 = vld [vmem:[%s770 + $0x38] sm:$0xf]
        %v906 = vld [vmem:[%s770 + $0x3c] sm:$0x1]
        %v908 = vshrl.u32 %v891, 16
        %v910 = vrot.slane %v908, 4
        %v911 = vshll.u32 %v891, 16
        %v913 = vrot.slane %v911, 5
        %v914 = vor.u32 %v910, %v913
        %v915 = vrot.slane %v914, 4
        %v917 = vshll.u32 %v892, 16
        %v919 = vrot.slane %v917, 5
        %v920 = vsel %vm390, %v915, %v919
        %v922 = vshrl.u32 %v893, 16
        %v924 = vrot.slane %v922, 4
        %v925 = vshll.u32 %v893, 16
        %v927 = vrot.slane %v925, 5
        %v928 = vor.u32 %v924, %v927
        %v929 = vrot.slane %v928, 4
        %v931 = vshll.u32 %v894, 16
        %v933 = vrot.slane %v931, 5
        %v934 = vsel %vm390, %v929, %v933
        %v936 = vshrl.u32 %v895, 16
        %v938 = vrot.slane %v936, 4
        %v939 = vshll.u32 %v895, 16
        %v941 = vrot.slane %v939, 5
        %v942 = vor.u32 %v938, %v941
        %v943 = vrot.slane %v942, 4
        %v945 = vshll.u32 %v896, 16
        %v947 = vrot.slane %v945, 5
        %v948 = vsel %vm390, %v943, %v947
        %v950 = vshrl.u32 %v897, 16
        %v952 = vrot.slane %v950, 4
        %v953 = vshll.u32 %v897, 16
        %v955 = vrot.slane %v953, 5
        %v956 = vor.u32 %v952, %v955
        %v957 = vrot.slane %v956, 4
        %v959 = vshll.u32 %v898, 16
        %v961 = vrot.slane %v959, 5
        %v962 = vsel %vm390, %v957, %v961
        %v964 = vshrl.u32 %v899, 16
        %v966 = vrot.slane %v964, 4
        %v967 = vshll.u32 %v899, 16
        %v969 = vrot.slane %v967, 5
        %v970 = vor.u32 %v966, %v969
        %v971 = vrot.slane %v970, 4
        %v973 = vshll.u32 %v900, 16
        %v975 = vrot.slane %v973, 5
        %v976 = vsel %vm390, %v971, %v975
        %v978 = vshrl.u32 %v901, 16
        %v980 = vrot.slane %v978, 4
        %v981 = vshll.u32 %v901, 16
        %v983 = vrot.slane %v981, 5
        %v984 = vor.u32 %v980, %v983
        %v985 = vrot.slane %v984, 4
        %v987 = vshll.u32 %v902, 16
        %v989 = vrot.slane %v987, 5
        %v990 = vsel %vm390, %v985, %v989
        %v992 = vshrl.u32 %v903, 16
        %v994 = vrot.slane %v992, 4
        %v995 = vshll.u32 %v903, 16
        %v997 = vrot.slane %v995, 5
        %v998 = vor.u32 %v994, %v997
        %v999 = vrot.slane %v998, 4
        %v1001 = vshll.u32 %v904, 16
        %v1003 = vrot.slane %v1001, 5
        %v1004 = vsel %vm390, %v999, %v1003
        %v1006 = vshrl.u32 %v905, 16
        %v1008 = vrot.slane %v1006, 4
        %v1009 = vshll.u32 %v905, 16
        %v1011 = vrot.slane %v1009, 5
        %v1012 = vor.u32 %v1008, %v1011
        %v1013 = vrot.slane %v1012, 4
        %v1015 = vshll.u32 %v906, 16
        %v1017 = vrot.slane %v1015, 5
        %v1018 = vsel %vm390, %v1013, %v1017
        %s1019 = sadd.s32 %s258, 4
        %s1020 = smul.addr %s1019, 2
        %s1021 = scalar_lea.vmem %s1, %s1020
        %v1022 = vld [vmem:[%s1021] sm:$0x3]
        %v1023 = vunpack.c.l.b16 %v920
        %v1024 = vunpack.c.l.b16 %v934
        %v1025 = vunpack.c.l.b16 %v948
        %v1026 = vunpack.c.l.b16 %v962
        %v1027 = vunpack.c.l.b16 %v976
        %v1028 = vunpack.c.l.b16 %v990
        %v1029 = vunpack.c.l.b16 %v1004
        %v1030 = vunpack.c.l.b16 %v1018
        %v1031 = vpack.c.b16 %v1024, %v1023
        %v1032 = vpack.c.b16 %v1026, %v1025
        %v1033 = vpack.c.b16 %v1028, %v1027
        %v1034 = vpack.c.b16 %v1030, %v1029
        %v1036 = vsel %vm282, %v1031, 0
        %v1039 = vsel %vm282, %v1032, 0
        %v1042 = vsel %vm282, %v1033, 0
        %v1045 = vsel %vm282, %v1034, 0
        %v1048 = vsel %vm295, %v1022, 0
        %1050 = vmatprep.subr.bf16.mxu0 0
        %1051 = vmatpush1.bf16.msra.mxu0 0
        %1052 = vmatprep.subr.bf16.mxu0 0
        %1053 = vmatpush1.bf16.msra.mxu0 0
        %1054 = vmatprep.subr.bf16.mxu0 0
        %1055 = vmatpush1.bf16.msra.mxu0 0
        %1056 = vmatprep.subr.bf16.mxu0 0
        %1057 = vmatpush1.bf16.msra.mxu0 0
        %1058 = vmatprep.subr.bf16.mxu0 0
        %1059 = vmatpush1.bf16.msra.mxu0 0
        %1060 = vmatprep.subr.bf16.mxu0 0
        %1061 = vmatpush1.bf16.msra.mxu0 0
        %1062 = vmatprep.subr.bf16.mxu0 0
        %1063 = vmatpush1.bf16.msra.mxu0 0
        %1064 = vmatprep.subr.bf16.mxu0 0
        %1065 = vmatpush1.bf16.msra.mxu0 %v1048
        %1066 = vmatprep.subr.bf16.mxu0 0
        %1067 = vmatpush2.bf16.msra.mxu0 0
        %1068 = vmatprep.subr.bf16.mxu0 0
        %1069 = vmatpush2.bf16.msra.mxu0 0
        %1070 = vmatprep.subr.bf16.mxu0 0
        %1071 = vmatpush2.bf16.msra.mxu0 0
        %1072 = vmatprep.subr.bf16.mxu0 0
        %1073 = vmatpush2.bf16.msra.mxu0 0
        %1074 = vmatprep.subr.bf16.mxu0 0
        %1075 = vmatpush2.bf16.msra.mxu0 0
        %1076 = vmatprep.subr.bf16.mxu0 0
        %1077 = vmatpush2.bf16.msra.mxu0 0
        %1078 = vmatprep.subr.bf16.mxu0 0
        %1079 = vmatpush2.bf16.msra.mxu0 0
        %1080 = vmatprep.subr.bf16.mxu0 0
        %1081 = vmatpush2.bf16.msra.mxu0 0
        %1082 = vmatprep.mubr.bf16.mxu0 0
        %1083 = vmatmul.mubr.bf16.gmra.mxu0 %v1036
        %v1084 = vpop.f32.mrf.mxu0
        %v1085 = vadd.f32 0.0, %v1084
        %v1086 = vpop.f32.mrf.mxu0
        %v1087 = vpop.f32.mrf.mxu0
        %v1088 = vadd.f32 0.0, %v1087
        %v1089 = vpop.f32.mrf.mxu0
        %1090 = vmatprep.mubr.bf16.mxu0 0
        %1091 = vmatmul.mubr.bf16.gmra.mxu0 %v1039
        %v1092 = vpop.f32.mrf.mxu0
        %v1093 = vadd.f32 0.0, %v1092
        %v1094 = vpop.f32.mrf.mxu0
        %v1095 = vpop.f32.mrf.mxu0
        %v1096 = vadd.f32 0.0, %v1095
        %v1097 = vpop.f32.mrf.mxu0
        %1098 = vmatprep.mubr.bf16.mxu0 0
        %1099 = vmatmul.mubr.bf16.gmra.mxu0 %v1042
        %v1100 = vpop.f32.mrf.mxu0
        %v1101 = vadd.f32 0.0, %v1100
        %v1102 = vpop.f32.mrf.mxu0
        %v1103 = vpop.f32.mrf.mxu0
        %v1104 = vadd.f32 0.0, %v1103
        %v1105 = vpop.f32.mrf.mxu0
        %1106 = vmatprep.mubr.bf16.mxu0 0
        %1107 = vmatmul.mubr.bf16.gmra.mxu0 %v1045
        %v1108 = vpop.f32.mrf.mxu0
        %v1109 = vadd.f32 0.0, %v1108
        %v1110 = vpop.f32.mrf.mxu0
        %v1111 = vpop.f32.mrf.mxu0
        %v1112 = vadd.f32 0.0, %v1111
        %v1113 = vpop.f32.mrf.mxu0
        %1114 = vdwg.mxu0
        %v1115 = vadd.f32 %v883, %v1085
        %v1116 = vadd.f32 %v884, %v1088
        %v1117 = vadd.f32 %v885, %v1093
        %v1118 = vadd.f32 %v886, %v1096
        %v1119 = vadd.f32 %v887, %v1101
        %v1120 = vadd.f32 %v888, %v1104
        %v1121 = vadd.f32 %v889, %v1109
        %v1122 = vadd.f32 %v890, %v1112
        %v1123 = vld [vmem:[%s770] sm:$0xe]
        %v1124 = vld [vmem:[%s770 + $0x8] sm:$0xe]
        %v1125 = vld [vmem:[%s770 + $0x10] sm:$0xe]
        %v1126 = vld [vmem:[%s770 + $0x18] sm:$0xe]
        %v1127 = vld [vmem:[%s770 + $0x20] sm:$0xe]
        %v1128 = vld [vmem:[%s770 + $0x28] sm:$0xe]
        %v1129 = vld [vmem:[%s770 + $0x30] sm:$0xe]
        %v1130 = vld [vmem:[%s770 + $0x38] sm:$0xe]
        %v1147 = vrot.slane %v1123, 5
        %v1148 = vrot.slane %v1147, 4
        %v1149 = vrot.slane %v892, 5
        %v1150 = vsel %vm633, %v1148, %v1149
        %v1151 = vrot.slane %v1124, 5
        %v1152 = vrot.slane %v1151, 4
        %v1153 = vrot.slane %v894, 5
        %v1154 = vsel %vm633, %v1152, %v1153
        %v1155 = vrot.slane %v1125, 5
        %v1156 = vrot.slane %v1155, 4
        %v1157 = vrot.slane %v896, 5
        %v1158 = vsel %vm633, %v1156, %v1157
        %v1159 = vrot.slane %v1126, 5
        %v1160 = vrot.slane %v1159, 4
        %v1161 = vrot.slane %v898, 5
        %v1162 = vsel %vm633, %v1160, %v1161
        %v1163 = vrot.slane %v1127, 5
        %v1164 = vrot.slane %v1163, 4
        %v1165 = vrot.slane %v900, 5
        %v1166 = vsel %vm633, %v1164, %v1165
        %v1167 = vrot.slane %v1128, 5
        %v1168 = vrot.slane %v1167, 4
        %v1169 = vrot.slane %v902, 5
        %v1170 = vsel %vm633, %v1168, %v1169
        %v1171 = vrot.slane %v1129, 5
        %v1172 = vrot.slane %v1171, 4
        %v1173 = vrot.slane %v904, 5
        %v1174 = vsel %vm633, %v1172, %v1173
        %v1175 = vrot.slane %v1130, 5
        %v1176 = vrot.slane %v1175, 4
        %v1177 = vrot.slane %v906, 5
        %v1178 = vsel %vm633, %v1176, %v1177
        %s1179 = sadd.s32 %s258, 5
        %s1180 = smul.addr %s1179, 2
        %s1181 = scalar_lea.vmem %s1, %s1180
        %v1182 = vld [vmem:[%s1181] sm:$0x3]
        %v1183 = vunpack.c.l.b16 %v1150
        %v1184 = vunpack.c.l.b16 %v1154
        %v1185 = vunpack.c.l.b16 %v1158
        %v1186 = vunpack.c.l.b16 %v1162
        %v1187 = vunpack.c.l.b16 %v1166
        %v1188 = vunpack.c.l.b16 %v1170
        %v1189 = vunpack.c.l.b16 %v1174
        %v1190 = vunpack.c.l.b16 %v1178
        %v1191 = vpack.c.b16 %v1184, %v1183
        %v1192 = vpack.c.b16 %v1186, %v1185
        %v1193 = vpack.c.b16 %v1188, %v1187
        %v1194 = vpack.c.b16 %v1190, %v1189
        %v1196 = vsel %vm282, %v1191, 0
        %v1199 = vsel %vm282, %v1192, 0
        %v1202 = vsel %vm282, %v1193, 0
        %v1205 = vsel %vm282, %v1194, 0
        %v1208 = vsel %vm295, %v1182, 0
        %1210 = vmatprep.subr.bf16.mxu0 0
        %1211 = vmatpush1.bf16.msra.mxu0 0
        %1212 = vmatprep.subr.bf16.mxu0 0
        %1213 = vmatpush1.bf16.msra.mxu0 0
        %1214 = vmatprep.subr.bf16.mxu0 0
        %1215 = vmatpush1.bf16.msra.mxu0 0
        %1216 = vmatprep.subr.bf16.mxu0 0
        %1217 = vmatpush1.bf16.msra.mxu0 0
        %1218 = vmatprep.subr.bf16.mxu0 0
        %1219 = vmatpush1.bf16.msra.mxu0 0
        %1220 = vmatprep.subr.bf16.mxu0 0
        %1221 = vmatpush1.bf16.msra.mxu0 0
        %1222 = vmatprep.subr.bf16.mxu0 0
        %1223 = vmatpush1.bf16.msra.mxu0 0
        %1224 = vmatprep.subr.bf16.mxu0 0
        %1225 = vmatpush1.bf16.msra.mxu0 %v1208
        %1226 = vmatprep.subr.bf16.mxu0 0
        %1227 = vmatpush2.bf16.msra.mxu0 0
        %1228 = vmatprep.subr.bf16.mxu0 0
        %1229 = vmatpush2.bf16.msra.mxu0 0
        %1230 = vmatprep.subr.bf16.mxu0 0
        %1231 = vmatpush2.bf16.msra.mxu0 0
        %1232 = vmatprep.subr.bf16.mxu0 0
        %1233 = vmatpush2.bf16.msra.mxu0 0
        %1234 = vmatprep.subr.bf16.mxu0 0
        %1235 = vmatpush2.bf16.msra.mxu0 0
        %1236 = vmatprep.subr.bf16.mxu0 0
        %1237 = vmatpush2.bf16.msra.mxu0 0
        %1238 = vmatprep.subr.bf16.mxu0 0
        %1239 = vmatpush2.bf16.msra.mxu0 0
        %1240 = vmatprep.subr.bf16.mxu0 0
        %1241 = vmatpush2.bf16.msra.mxu0 0
        %1242 = vmatprep.mubr.bf16.mxu0 0
        %1243 = vmatmul.mubr.bf16.gmra.mxu0 %v1196
        %v1244 = vpop.f32.mrf.mxu0
        %v1245 = vadd.f32 0.0, %v1244
        %v1246 = vpop.f32.mrf.mxu0
        %v1247 = vpop.f32.mrf.mxu0
        %v1248 = vadd.f32 0.0, %v1247
        %v1249 = vpop.f32.mrf.mxu0
        %1250 = vmatprep.mubr.bf16.mxu0 0
        %1251 = vmatmul.mubr.bf16.gmra.mxu0 %v1199
        %v1252 = vpop.f32.mrf.mxu0
        %v1253 = vadd.f32 0.0, %v1252
        %v1254 = vpop.f32.mrf.mxu0
        %v1255 = vpop.f32.mrf.mxu0
        %v1256 = vadd.f32 0.0, %v1255
        %v1257 = vpop.f32.mrf.mxu0
        %1258 = vmatprep.mubr.bf16.mxu0 0
        %1259 = vmatmul.mubr.bf16.gmra.mxu0 %v1202
        %v1260 = vpop.f32.mrf.mxu0
        %v1261 = vadd.f32 0.0, %v1260
        %v1262 = vpop.f32.mrf.mxu0
        %v1263 = vpop.f32.mrf.mxu0
        %v1264 = vadd.f32 0.0, %v1263
        %v1265 = vpop.f32.mrf.mxu0
        %1266 = vmatprep.mubr.bf16.mxu0 0
        %1267 = vmatmul.mubr.bf16.gmra.mxu0 %v1205
        %v1268 = vpop.f32.mrf.mxu0
        %v1269 = vadd.f32 0.0, %v1268
        %v1270 = vpop.f32.mrf.mxu0
        %v1271 = vpop.f32.mrf.mxu0
        %v1272 = vadd.f32 0.0, %v1271
        %v1273 = vpop.f32.mrf.mxu0
        %1274 = vdwg.mxu0
        %v1275 = vadd.f32 %v1115, %v1245
        %v1276 = vadd.f32 %v1116, %v1248
        %v1277 = vadd.f32 %v1117, %v1253
        %v1278 = vadd.f32 %v1118, %v1256
        %v1279 = vadd.f32 %v1119, %v1261
        %v1280 = vadd.f32 %v1120, %v1264
        %v1281 = vadd.f32 %v1121, %v1269
        %v1282 = vadd.f32 %v1122, %v1272
        %s1283 = scalar_lea.vmem %s220, 16
        %v1284 = vld [vmem:[%s1283] sm:$0xf]
        %v1285 = vld [vmem:[%s1283 + $0x8] sm:$0xf]
        %v1286 = vld [vmem:[%s1283 + $0x10] sm:$0xf]
        %v1287 = vld [vmem:[%s1283 + $0x18] sm:$0xf]
        %v1288 = vld [vmem:[%s1283 + $0x20] sm:$0xf]
        %v1289 = vld [vmem:[%s1283 + $0x28] sm:$0xf]
        %v1290 = vld [vmem:[%s1283 + $0x30] sm:$0xf]
        %v1291 = vld [vmem:[%s1283 + $0x38] sm:$0xf]
        %s1292 = sadd.s32 %s258, 6
        %s1293 = smul.addr %s1292, 2
        %s1294 = scalar_lea.vmem %s1, %s1293
        %v1295 = vld [vmem:[%s1294] sm:$0x3]
        %v1304 = vunpack.c.l.b16 %v1284
        %v1305 = vunpack.c.l.b16 %v1285
        %v1306 = vunpack.c.l.b16 %v1286
        %v1307 = vunpack.c.l.b16 %v1287
        %v1308 = vunpack.c.l.b16 %v1288
        %v1309 = vunpack.c.l.b16 %v1289
        %v1310 = vunpack.c.l.b16 %v1290
        %v1311 = vunpack.c.l.b16 %v1291
        %v1312 = vpack.c.b16 %v1305, %v1304
        %v1313 = vpack.c.b16 %v1307, %v1306
        %v1314 = vpack.c.b16 %v1309, %v1308
        %v1315 = vpack.c.b16 %v1311, %v1310
        %v1317 = vsel %vm282, %v1312, 0
        %v1320 = vsel %vm282, %v1313, 0
        %v1323 = vsel %vm282, %v1314, 0
        %v1326 = vsel %vm282, %v1315, 0
        %v1329 = vsel %vm295, %v1295, 0
        %1331 = vmatprep.subr.bf16.mxu0 0
        %1332 = vmatpush1.bf16.msra.mxu0 0
        %1333 = vmatprep.subr.bf16.mxu0 0
        %1334 = vmatpush1.bf16.msra.mxu0 0
        %1335 = vmatprep.subr.bf16.mxu0 0
        %1336 = vmatpush1.bf16.msra.mxu0 0
        %1337 = vmatprep.subr.bf16.mxu0 0
        %1338 = vmatpush1.bf16.msra.mxu0 0
        %1339 = vmatprep.subr.bf16.mxu0 0
        %1340 = vmatpush1.bf16.msra.mxu0 0
        %1341 = vmatprep.subr.bf16.mxu0 0
        %1342 = vmatpush1.bf16.msra.mxu0 0
        %1343 = vmatprep.subr.bf16.mxu0 0
        %1344 = vmatpush1.bf16.msra.mxu0 0
        %1345 = vmatprep.subr.bf16.mxu0 0
        %1346 = vmatpush1.bf16.msra.mxu0 %v1329
        %1347 = vmatprep.subr.bf16.mxu0 0
        %1348 = vmatpush2.bf16.msra.mxu0 0
        %1349 = vmatprep.subr.bf16.mxu0 0
        %1350 = vmatpush2.bf16.msra.mxu0 0
        %1351 = vmatprep.subr.bf16.mxu0 0
        %1352 = vmatpush2.bf16.msra.mxu0 0
        %1353 = vmatprep.subr.bf16.mxu0 0
        %1354 = vmatpush2.bf16.msra.mxu0 0
        %1355 = vmatprep.subr.bf16.mxu0 0
        %1356 = vmatpush2.bf16.msra.mxu0 0
        %1357 = vmatprep.subr.bf16.mxu0 0
        %1358 = vmatpush2.bf16.msra.mxu0 0
        %1359 = vmatprep.subr.bf16.mxu0 0
        %1360 = vmatpush2.bf16.msra.mxu0 0
        %1361 = vmatprep.subr.bf16.mxu0 0
        %1362 = vmatpush2.bf16.msra.mxu0 0
        %1363 = vmatprep.mubr.bf16.mxu0 0
        %1364 = vmatmul.mubr.bf16.gmra.mxu0 %v1317
        %v1365 = vpop.f32.mrf.mxu0
        %v1366 = vadd.f32 0.0, %v1365
        %v1367 = vpop.f32.mrf.mxu0
        %v1368 = vpop.f32.mrf.mxu0
        %v1369 = vadd.f32 0.0, %v1368
        %v1370 = vpop.f32.mrf.mxu0
        %1371 = vmatprep.mubr.bf16.mxu0 0
        %1372 = vmatmul.mubr.bf16.gmra.mxu0 %v1320
        %v1373 = vpop.f32.mrf.mxu0
        %v1374 = vadd.f32 0.0, %v1373
        %v1375 = vpop.f32.mrf.mxu0
        %v1376 = vpop.f32.mrf.mxu0
        %v1377 = vadd.f32 0.0, %v1376
        %v1378 = vpop.f32.mrf.mxu0
        %1379 = vmatprep.mubr.bf16.mxu0 0
        %1380 = vmatmul.mubr.bf16.gmra.mxu0 %v1323
        %v1381 = vpop.f32.mrf.mxu0
        %v1382 = vadd.f32 0.0, %v1381
        %v1383 = vpop.f32.mrf.mxu0
        %v1384 = vpop.f32.mrf.mxu0
        %v1385 = vadd.f32 0.0, %v1384
        %v1386 = vpop.f32.mrf.mxu0
        %1387 = vmatprep.mubr.bf16.mxu0 0
        %1388 = vmatmul.mubr.bf16.gmra.mxu0 %v1326
        %v1389 = vpop.f32.mrf.mxu0
        %v1390 = vadd.f32 0.0, %v1389
        %v1391 = vpop.f32.mrf.mxu0
        %v1392 = vpop.f32.mrf.mxu0
        %v1393 = vadd.f32 0.0, %v1392
        %v1394 = vpop.f32.mrf.mxu0
        %1395 = vdwg.mxu0
        %v1396 = vadd.f32 %v1275, %v1366
        %v1397 = vadd.f32 %v1276, %v1369
        %v1398 = vadd.f32 %v1277, %v1374
        %v1399 = vadd.f32 %v1278, %v1377
        %v1400 = vadd.f32 %v1279, %v1382
        %v1401 = vadd.f32 %v1280, %v1385
        %v1402 = vadd.f32 %v1281, %v1390
        %v1403 = vadd.f32 %v1282, %v1393
        %v1404 = vld [vmem:[%s1283] sm:$0xf]
        %v1405 = vld [vmem:[%s1283 + $0x4] sm:$0x1]
        %v1406 = vld [vmem:[%s1283 + $0x8] sm:$0xf]
        %v1407 = vld [vmem:[%s1283 + $0xc] sm:$0x1]
        %v1408 = vld [vmem:[%s1283 + $0x10] sm:$0xf]
        %v1409 = vld [vmem:[%s1283 + $0x14] sm:$0x1]
        %v1410 = vld [vmem:[%s1283 + $0x18] sm:$0xf]
        %v1411 = vld [vmem:[%s1283 + $0x1c] sm:$0x1]
        %v1412 = vld [vmem:[%s1283 + $0x20] sm:$0xf]
        %v1413 = vld [vmem:[%s1283 + $0x24] sm:$0x1]
        %v1414 = vld [vmem:[%s1283 + $0x28] sm:$0xf]
        %v1415 = vld [vmem:[%s1283 + $0x2c] sm:$0x1]
        %v1416 = vld [vmem:[%s1283 + $0x30] sm:$0xf]
        %v1417 = vld [vmem:[%s1283 + $0x34] sm:$0x1]
        %v1418 = vld [vmem:[%s1283 + $0x38] sm:$0xf]
        %v1419 = vld [vmem:[%s1283 + $0x3c] sm:$0x1]
        %v1421 = vshrl.u32 %v1404, 16
        %v1423 = vrot.slane %v1421, 4
        %v1424 = vshll.u32 %v1404, 16
        %v1426 = vrot.slane %v1424, 5
        %v1427 = vor.u32 %v1423, %v1426
        %v1428 = vrot.slane %v1427, 4
        %v1430 = vshll.u32 %v1405, 16
        %v1432 = vrot.slane %v1430, 5
        %v1433 = vsel %vm390, %v1428, %v1432
        %v1435 = vshrl.u32 %v1406, 16
        %v1437 = vrot.slane %v1435, 4
        %v1438 = vshll.u32 %v1406, 16
        %v1440 = vrot.slane %v1438, 5
        %v1441 = vor.u32 %v1437, %v1440
        %v1442 = vrot.slane %v1441, 4
        %v1444 = vshll.u32 %v1407, 16
        %v1446 = vrot.slane %v1444, 5
        %v1447 = vsel %vm390, %v1442, %v1446
        %v1449 = vshrl.u32 %v1408, 16
        %v1451 = vrot.slane %v1449, 4
        %v1452 = vshll.u32 %v1408, 16
        %v1454 = vrot.slane %v1452, 5
        %v1455 = vor.u32 %v1451, %v1454
        %v1456 = vrot.slane %v1455, 4
        %v1458 = vshll.u32 %v1409, 16
        %v1460 = vrot.slane %v1458, 5
        %v1461 = vsel %vm390, %v1456, %v1460
        %v1463 = vshrl.u32 %v1410, 16
        %v1465 = vrot.slane %v1463, 4
        %v1466 = vshll.u32 %v1410, 16
        %v1468 = vrot.slane %v1466, 5
        %v1469 = vor.u32 %v1465, %v1468
        %v1470 = vrot.slane %v1469, 4
        %v1472 = vshll.u32 %v1411, 16
        %v1474 = vrot.slane %v1472, 5
        %v1475 = vsel %vm390, %v1470, %v1474
        %v1477 = vshrl.u32 %v1412, 16
        %v1479 = vrot.slane %v1477, 4
        %v1480 = vshll.u32 %v1412, 16
        %v1482 = vrot.slane %v1480, 5
        %v1483 = vor.u32 %v1479, %v1482
        %v1484 = vrot.slane %v1483, 4
        %v1486 = vshll.u32 %v1413, 16
        %v1488 = vrot.slane %v1486, 5
        %v1489 = vsel %vm390, %v1484, %v1488
        %v1491 = vshrl.u32 %v1414, 16
        %v1493 = vrot.slane %v1491, 4
        %v1494 = vshll.u32 %v1414, 16
        %v1496 = vrot.slane %v1494, 5
        %v1497 = vor.u32 %v1493, %v1496
        %v1498 = vrot.slane %v1497, 4
        %v1500 = vshll.u32 %v1415, 16
        %v1502 = vrot.slane %v1500, 5
        %v1503 = vsel %vm390, %v1498, %v1502
        %v1505 = vshrl.u32 %v1416, 16
        %v1507 = vrot.slane %v1505, 4
        %v1508 = vshll.u32 %v1416, 16
        %v1510 = vrot.slane %v1508, 5
        %v1511 = vor.u32 %v1507, %v1510
        %v1512 = vrot.slane %v1511, 4
        %v1514 = vshll.u32 %v1417, 16
        %v1516 = vrot.slane %v1514, 5
        %v1517 = vsel %vm390, %v1512, %v1516
        %v1519 = vshrl.u32 %v1418, 16
        %v1521 = vrot.slane %v1519, 4
        %v1522 = vshll.u32 %v1418, 16
        %v1524 = vrot.slane %v1522, 5
        %v1525 = vor.u32 %v1521, %v1524
        %v1526 = vrot.slane %v1525, 4
        %v1528 = vshll.u32 %v1419, 16
        %v1530 = vrot.slane %v1528, 5
        %v1531 = vsel %vm390, %v1526, %v1530
        %s1532 = sadd.s32 %s258, 7
        %s1533 = smul.addr %s1532, 2
        %s1534 = scalar_lea.vmem %s1, %s1533
        %v1535 = vld [vmem:[%s1534] sm:$0x3]
        %v1536 = vunpack.c.l.b16 %v1433
        %v1537 = vunpack.c.l.b16 %v1447
        %v1538 = vunpack.c.l.b16 %v1461
        %v1539 = vunpack.c.l.b16 %v1475
        %v1540 = vunpack.c.l.b16 %v1489
        %v1541 = vunpack.c.l.b16 %v1503
        %v1542 = vunpack.c.l.b16 %v1517
        %v1543 = vunpack.c.l.b16 %v1531
        %v1544 = vpack.c.b16 %v1537, %v1536
        %v1545 = vpack.c.b16 %v1539, %v1538
        %v1546 = vpack.c.b16 %v1541, %v1540
        %v1547 = vpack.c.b16 %v1543, %v1542
        %v1549 = vsel %vm282, %v1544, 0
        %v1552 = vsel %vm282, %v1545, 0
        %v1555 = vsel %vm282, %v1546, 0
        %v1558 = vsel %vm282, %v1547, 0
        %v1561 = vsel %vm295, %v1535, 0
        %1563 = vmatprep.subr.bf16.mxu0 0
        %1564 = vmatpush1.bf16.msra.mxu0 0
        %1565 = vmatprep.subr.bf16.mxu0 0
        %1566 = vmatpush1.bf16.msra.mxu0 0
        %1567 = vmatprep.subr.bf16.mxu0 0
        %1568 = vmatpush1.bf16.msra.mxu0 0
        %1569 = vmatprep.subr.bf16.mxu0 0
        %1570 = vmatpush1.bf16.msra.mxu0 0
        %1571 = vmatprep.subr.bf16.mxu0 0
        %1572 = vmatpush1.bf16.msra.mxu0 0
        %1573 = vmatprep.subr.bf16.mxu0 0
        %1574 = vmatpush1.bf16.msra.mxu0 0
        %1575 = vmatprep.subr.bf16.mxu0 0
        %1576 = vmatpush1.bf16.msra.mxu0 0
        %1577 = vmatprep.subr.bf16.mxu0 0
        %1578 = vmatpush1.bf16.msra.mxu0 %v1561
        %1579 = vmatprep.subr.bf16.mxu0 0
        %1580 = vmatpush2.bf16.msra.mxu0 0
        %1581 = vmatprep.subr.bf16.mxu0 0
        %1582 = vmatpush2.bf16.msra.mxu0 0
        %1583 = vmatprep.subr.bf16.mxu0 0
        %1584 = vmatpush2.bf16.msra.mxu0 0
        %1585 = vmatprep.subr.bf16.mxu0 0
        %1586 = vmatpush2.bf16.msra.mxu0 0
        %1587 = vmatprep.subr.bf16.mxu0 0
        %1588 = vmatpush2.bf16.msra.mxu0 0
        %1589 = vmatprep.subr.bf16.mxu0 0
        %1590 = vmatpush2.bf16.msra.mxu0 0
        %1591 = vmatprep.subr.bf16.mxu0 0
        %1592 = vmatpush2.bf16.msra.mxu0 0
        %1593 = vmatprep.subr.bf16.mxu0 0
        %1594 = vmatpush2.bf16.msra.mxu0 0
        %1595 = vmatprep.mubr.bf16.mxu0 0
        %1596 = vmatmul.mubr.bf16.gmra.mxu0 %v1549
        %v1597 = vpop.f32.mrf.mxu0
        %v1598 = vadd.f32 0.0, %v1597
        %v1599 = vpop.f32.mrf.mxu0
        %v1600 = vpop.f32.mrf.mxu0
        %v1601 = vadd.f32 0.0, %v1600
        %v1602 = vpop.f32.mrf.mxu0
        %1603 = vmatprep.mubr.bf16.mxu0 0
        %1604 = vmatmul.mubr.bf16.gmra.mxu0 %v1552
        %v1605 = vpop.f32.mrf.mxu0
        %v1606 = vadd.f32 0.0, %v1605
        %v1607 = vpop.f32.mrf.mxu0
        %v1608 = vpop.f32.mrf.mxu0
        %v1609 = vadd.f32 0.0, %v1608
        %v1610 = vpop.f32.mrf.mxu0
        %1611 = vmatprep.mubr.bf16.mxu0 0
        %1612 = vmatmul.mubr.bf16.gmra.mxu0 %v1555
        %v1613 = vpop.f32.mrf.mxu0
        %v1614 = vadd.f32 0.0, %v1613
        %v1615 = vpop.f32.mrf.mxu0
        %v1616 = vpop.f32.mrf.mxu0
        %v1617 = vadd.f32 0.0, %v1616
        %v1618 = vpop.f32.mrf.mxu0
        %1619 = vmatprep.mubr.bf16.mxu0 0
        %1620 = vmatmul.mubr.bf16.gmra.mxu0 %v1558
        %v1621 = vpop.f32.mrf.mxu0
        %v1622 = vadd.f32 0.0, %v1621
        %v1623 = vpop.f32.mrf.mxu0
        %v1624 = vpop.f32.mrf.mxu0
        %v1625 = vadd.f32 0.0, %v1624
        %v1626 = vpop.f32.mrf.mxu0
        %1627 = vdwg.mxu0
        %v1628 = vadd.f32 %v1396, %v1598
        %v1629 = vadd.f32 %v1397, %v1601
        %v1630 = vadd.f32 %v1398, %v1606
        %v1631 = vadd.f32 %v1399, %v1609
        %v1632 = vadd.f32 %v1400, %v1614
        %v1633 = vadd.f32 %v1401, %v1617
        %v1634 = vadd.f32 %v1402, %v1622
        %v1635 = vadd.f32 %v1403, %v1625
        %v1636 = vld [vmem:[%s1283] sm:$0xe]
        %v1637 = vld [vmem:[%s1283 + $0x8] sm:$0xe]
        %v1638 = vld [vmem:[%s1283 + $0x10] sm:$0xe]
        %v1639 = vld [vmem:[%s1283 + $0x18] sm:$0xe]
        %v1640 = vld [vmem:[%s1283 + $0x20] sm:$0xe]
        %v1641 = vld [vmem:[%s1283 + $0x28] sm:$0xe]
        %v1642 = vld [vmem:[%s1283 + $0x30] sm:$0xe]
        %v1643 = vld [vmem:[%s1283 + $0x38] sm:$0xe]
        %v1660 = vrot.slane %v1636, 5
        %v1661 = vrot.slane %v1660, 4
        %v1662 = vrot.slane %v1405, 5
        %v1663 = vsel %vm633, %v1661, %v1662
        %v1664 = vrot.slane %v1637, 5
        %v1665 = vrot.slane %v1664, 4
        %v1666 = vrot.slane %v1407, 5
        %v1667 = vsel %vm633, %v1665, %v1666
        %v1668 = vrot.slane %v1638, 5
        %v1669 = vrot.slane %v1668, 4
        %v1670 = vrot.slane %v1409, 5
        %v1671 = vsel %vm633, %v1669, %v1670
        %v1672 = vrot.slane %v1639, 5
        %v1673 = vrot.slane %v1672, 4
        %v1674 = vrot.slane %v1411, 5
        %v1675 = vsel %vm633, %v1673, %v1674
        %v1676 = vrot.slane %v1640, 5
        %v1677 = vrot.slane %v1676, 4
        %v1678 = vrot.slane %v1413, 5
        %v1679 = vsel %vm633, %v1677, %v1678
        %v1680 = vrot.slane %v1641, 5
        %v1681 = vrot.slane %v1680, 4
        %v1682 = vrot.slane %v1415, 5
        %v1683 = vsel %vm633, %v1681, %v1682
        %v1684 = vrot.slane %v1642, 5
        %v1685 = vrot.slane %v1684, 4
        %v1686 = vrot.slane %v1417, 5
        %v1687 = vsel %vm633, %v1685, %v1686
        %v1688 = vrot.slane %v1643, 5
        %v1689 = vrot.slane %v1688, 4
        %v1690 = vrot.slane %v1419, 5
        %v1691 = vsel %vm633, %v1689, %v1690
        %s1692 = sadd.s32 %s258, 8
        %s1693 = smul.addr %s1692, 2
        %s1694 = scalar_lea.vmem %s1, %s1693
        %v1695 = vld [vmem:[%s1694] sm:$0x3]
        %v1696 = vunpack.c.l.b16 %v1663
        %v1697 = vunpack.c.l.b16 %v1667
        %v1698 = vunpack.c.l.b16 %v1671
        %v1699 = vunpack.c.l.b16 %v1675
        %v1700 = vunpack.c.l.b16 %v1679
        %v1701 = vunpack.c.l.b16 %v1683
        %v1702 = vunpack.c.l.b16 %v1687
        %v1703 = vunpack.c.l.b16 %v1691
        %v1704 = vpack.c.b16 %v1697, %v1696
        %v1705 = vpack.c.b16 %v1699, %v1698
        %v1706 = vpack.c.b16 %v1701, %v1700
        %v1707 = vpack.c.b16 %v1703, %v1702
        %v1709 = vsel %vm282, %v1704, 0
        %v1712 = vsel %vm282, %v1705, 0
        %v1715 = vsel %vm282, %v1706, 0
        %v1718 = vsel %vm282, %v1707, 0
        %v1721 = vsel %vm295, %v1695, 0
        %1723 = vmatprep.subr.bf16.mxu0 0
        %1724 = vmatpush1.bf16.msra.mxu0 0
        %1725 = vmatprep.subr.bf16.mxu0 0
        %1726 = vmatpush1.bf16.msra.mxu0 0
        %1727 = vmatprep.subr.bf16.mxu0 0
        %1728 = vmatpush1.bf16.msra.mxu0 0
        %1729 = vmatprep.subr.bf16.mxu0 0
        %1730 = vmatpush1.bf16.msra.mxu0 0
        %1731 = vmatprep.subr.bf16.mxu0 0
        %1732 = vmatpush1.bf16.msra.mxu0 0
        %1733 = vmatprep.subr.bf16.mxu0 0
        %1734 = vmatpush1.bf16.msra.mxu0 0
        %1735 = vmatprep.subr.bf16.mxu0 0
        %1736 = vmatpush1.bf16.msra.mxu0 0
        %1737 = vmatprep.subr.bf16.mxu0 0
        %1738 = vmatpush1.bf16.msra.mxu0 %v1721
        %1739 = vmatprep.subr.bf16.mxu0 0
        %1740 = vmatpush2.bf16.msra.mxu0 0
        %1741 = vmatprep.subr.bf16.mxu0 0
        %1742 = vmatpush2.bf16.msra.mxu0 0
        %1743 = vmatprep.subr.bf16.mxu0 0
        %1744 = vmatpush2.bf16.msra.mxu0 0
        %1745 = vmatprep.subr.bf16.mxu0 0
        %1746 = vmatpush2.bf16.msra.mxu0 0
        %1747 = vmatprep.subr.bf16.mxu0 0
        %1748 = vmatpush2.bf16.msra.mxu0 0
        %1749 = vmatprep.subr.bf16.mxu0 0
        %1750 = vmatpush2.bf16.msra.mxu0 0
        %1751 = vmatprep.subr.bf16.mxu0 0
        %1752 = vmatpush2.bf16.msra.mxu0 0
        %1753 = vmatprep.subr.bf16.mxu0 0
        %1754 = vmatpush2.bf16.msra.mxu0 0
        %1755 = vmatprep.mubr.bf16.mxu0 0
        %1756 = vmatmul.mubr.bf16.gmra.mxu0 %v1709
        %v1757 = vpop.f32.mrf.mxu0
        %v1758 = vadd.f32 0.0, %v1757
        %v1759 = vpop.f32.mrf.mxu0
        %v1760 = vpop.f32.mrf.mxu0
        %v1761 = vadd.f32 0.0, %v1760
        %v1762 = vpop.f32.mrf.mxu0
        %1763 = vmatprep.mubr.bf16.mxu0 0
        %1764 = vmatmul.mubr.bf16.gmra.mxu0 %v1712
        %v1765 = vpop.f32.mrf.mxu0
        %v1766 = vadd.f32 0.0, %v1765
        %v1767 = vpop.f32.mrf.mxu0
        %v1768 = vpop.f32.mrf.mxu0
        %v1769 = vadd.f32 0.0, %v1768
        %v1770 = vpop.f32.mrf.mxu0
        %1771 = vmatprep.mubr.bf16.mxu0 0
        %1772 = vmatmul.mubr.bf16.gmra.mxu0 %v1715
        %v1773 = vpop.f32.mrf.mxu0
        %v1774 = vadd.f32 0.0, %v1773
        %v1775 = vpop.f32.mrf.mxu0
        %v1776 = vpop.f32.mrf.mxu0
        %v1777 = vadd.f32 0.0, %v1776
        %v1778 = vpop.f32.mrf.mxu0
        %1779 = vmatprep.mubr.bf16.mxu0 0
        %1780 = vmatmul.mubr.bf16.gmra.mxu0 %v1718
        %v1781 = vpop.f32.mrf.mxu0
        %v1782 = vadd.f32 0.0, %v1781
        %v1783 = vpop.f32.mrf.mxu0
        %v1784 = vpop.f32.mrf.mxu0
        %v1785 = vadd.f32 0.0, %v1784
        %v1786 = vpop.f32.mrf.mxu0
        %1787 = vdwg.mxu0
        %v1788 = vadd.f32 %v1628, %v1758
        %v1789 = vadd.f32 %v1629, %v1761
        %v1790 = vadd.f32 %v1630, %v1766
        %v1791 = vadd.f32 %v1631, %v1769
        %v1792 = vadd.f32 %v1632, %v1774
        %v1793 = vadd.f32 %v1633, %v1777
        %v1794 = vadd.f32 %v1634, %v1782
        %v1795 = vadd.f32 %v1635, %v1785
        %1796 = vst [vmem:[#allocation2] sm:$0xff] %v1788
        %1797 = vst [vmem:[#allocation2 + $0x8] sm:$0xff] %v1789
        %1798 = vst [vmem:[#allocation2 + $0x10] sm:$0xff] %v1790
        %1799 = vst [vmem:[#allocation2 + $0x18] sm:$0xff] %v1791
        %1800 = vst [vmem:[#allocation2 + $0x20] sm:$0xff] %v1792
        %1801 = vst [vmem:[#allocation2 + $0x28] sm:$0xff] %v1793
        %1802 = vst [vmem:[#allocation2 + $0x30] sm:$0xff] %v1794
        %1803 = vst [vmem:[#allocation2 + $0x38] sm:$0xff] %v1795
        %p1804 = scmp.eq.s32.totalorder %s24, 1
        // Predicated region
        $region37: #{tpu_custom_call.1} parent=31 // pred_check
          %p1805 = pneg %p1804
        $region38: #{tpu_custom_call.1} parent=31 // pred_check_branch
          %1807 = sbr.rel (%p1805) target = $region40
        $region39: #{tpu_custom_call.1} parent=31 // pred_region
          %v1808 = vld [vmem:[#allocation2] sm:$0xff]
          %v1809 = vld [vmem:[#allocation2 + $0x8] sm:$0xff]
          %v1810 = vld [vmem:[#allocation2 + $0x10] sm:$0xff]
          %v1811 = vld [vmem:[#allocation2 + $0x18] sm:$0xff]
          %v1812 = vld [vmem:[#allocation2 + $0x20] sm:$0xff]
          %v1813 = vld [vmem:[#allocation2 + $0x28] sm:$0xff]
          %v1814 = vld [vmem:[#allocation2 + $0x30] sm:$0xff]
          %v1815 = vld [vmem:[#allocation2 + $0x38] sm:$0xff]
          %v1816 = vld [vmem:[%s226] sm:$0x1]
          %v1818 = vlaneseq
          %v1819 = vshrl.u32 %v1818, 7
          %v1820 = vsub.s32 0, %v1819
          %v1821 = vrot.slane %v1816, %v1820
          %v1823 = vadd.f32 %v1808, %v1821
          %v1824 = vadd.f32 %v1809, %v1821
          %v1825 = vadd.f32 %v1810, %v1821
          %v1826 = vadd.f32 %v1811, %v1821
          %v1827 = vadd.f32 %v1812, %v1821
          %v1828 = vadd.f32 %v1813, %v1821
          %v1829 = vadd.f32 %v1814, %v1821
          %v1830 = vadd.f32 %v1815, %v1821
          %1831 = vst [vmem:[%s212] sm:$0xff] %v1823
          %1832 = vst [vmem:[%s212 + $0x8] sm:$0xff] %v1824
          %1833 = vst [vmem:[%s212 + $0x10] sm:$0xff] %v1825
          %1834 = vst [vmem:[%s212 + $0x18] sm:$0xff] %v1826
          %1835 = vst [vmem:[%s212 + $0x20] sm:$0xff] %v1827
          %1836 = vst [vmem:[%s212 + $0x28] sm:$0xff] %v1828
          %1837 = vst [vmem:[%s212 + $0x30] sm:$0xff] %v1829
          %1838 = vst [vmem:[%s212 + $0x38] sm:$0xff] %v1830
        $region40: #{tpu_custom_call.1} parent=31 // pred_fallthru
          _
        %s1839 = sand.u32 %s127, 1
        %s1840 = scalar_lea.sflag [#allocation4], %s1839
        %s1841 = sand.u32 %s127, 1
        %s1842 = smul.addr %s1841, 64
        %s1843 = scalar_lea.vmem [#allocation3], %s1842
        // Predicated region
        $region41: #{tpu_custom_call.1} parent=31 // pred_check
          %p1844 = pneg %p137
        $region42: #{tpu_custom_call.1} parent=31 // pred_check_branch
          %1846 = sbr.rel (%p1844) target = $region44
        $region43: #{tpu_custom_call.1} parent=31 // pred_region
          %s1847 = smul.u32 %s22, 2
          %s1848 = sadd.s32 %s1847, %s23
          %s1850 = ssub.s32 1024, 1024
          %1851 = vsyncadd %s1840, %s1850
          %s1852 = smul.addr %s1848, 8
          %s1853 = smul.addr %s1852, 128
          %s1854 = scalar_lea.hbm %s3, %s1853
          %s1855 = sshll.u32 %s1843, 4
          %s1856 = int_to_ptr.vmem [resolvable:$true] %s1855
          %1861 = dma.vmem_to_hbm [thread:$0]  %s1856, 1024, %s1854, %s1840, 128, 128, 8
        $region44: #{tpu_custom_call.1} parent=31 // pred_fallthru
          _
      $region32: #{tpu_custom_call.1} parent=5 // pred_fallthru
        _
      %p1862 = scmp.le.s32.totalorder 2, %s12
      // Predicated region
      $region45: #{tpu_custom_call.1} parent=5 // pred_check
        %p1863 = pneg %p1862
      $region46: #{tpu_custom_call.1} parent=5 // pred_check_branch
        %1865 = sbr.rel (%p1863) target = $region48
      $region47: #{tpu_custom_call.1} parent=5 // pred_region
        %s1866 = ssub.s32 %s12, 2
        // Predicated region
        $region49: #{tpu_custom_call.1} parent=47 // pred_check
          %p1867 = pneg %p143
        $region50: #{tpu_custom_call.1} parent=47 // pred_check_branch
          %1869 = sbr.rel (%p1867) target = $region52
        $region51: #{tpu_custom_call.1} parent=47 // pred_region
          %s1870 = sand.u32 %s128, 1
          %s1871 = scalar_lea.sflag [#allocation4], %s1870
          %s1872 = sand.u32 %s128, 1
          %s1873 = smul.addr %s1872, 64
          %s1874 = scalar_lea.vmem [#allocation3], %s1873
          %1875 = dma.done %s1871, 1024
        $region52: #{tpu_custom_call.1} parent=47 // pred_fallthru
          _
      $region48: #{tpu_custom_call.1} parent=5 // pred_fallthru
        _
    $region6: #{tpu_custom_call.1} parent=1 // loop_footer
      %s16 = sadd.s32 1, %s12
    $region7: #{tpu_custom_call.1} parent=1 // loop_footer_branch
      %11 = sbr.rel target = $region3
    $region8: #{tpu_custom_call.1} parent=1 // loop_exit
      _
    %1876 = vsyncpa [#allocation4], 1
    %s1877 = scalar_lea.sflag [#allocation4], 1
    %1878 = vsyncpa %s1877, 1

</llo_original>
